<compile_context>
chip_gen: v7x
topology: tpu7x:2x2x1
jax: 0.10.0
libtpu: 0.0.40
codegen_flags: <defaults>
</compile_context>

<pallas_src>
import functools

import jax
import jax.numpy as jnp
import numpy as np
from jax.experimental import pallas as pl
from jax.experimental.pallas import tpu as pltpu

IN_CH = 8        # in_ch  (must be divisible by n_heads and by GROUPS)
OUT_CH = 8       # out_ch (must be divisible by GROUPS)
N_HEADS = 2
GROUPS = 4
CS = 2 * IN_CH             # stacked rgb+flow channels (16 -> one bf16 vreg)
HK = IN_CH // N_HEADS      # channels per head

# column order inside the packed (CS, 9) bias table
_BQ, _BK, _BV, _BO, _B1, _B2, _LN_G, _LN_B, _BG = range(9)

_VMEM_LIMIT = 40 * 1024 * 1024   # leave headroom on v7x (64 MiB physical VMEM)


# ----------------------------------------------------------------------------
# Pass 1: online accumulation of K spatial-softmax stats + (key, value) context
# ----------------------------------------------------------------------------
def _ctx_pass_kernel(x_ref, w_qkvo_ref, b_ref, ctx_ref, m_sc, s_sc, ctx_sc,
                     *, l_valid, lane_tile):
    l = pl.program_id(1)

    @pl.when(l == 0)
    def _():
        m_sc[...] = jnp.full(m_sc.shape, -jnp.inf, m_sc.dtype)
        s_sc[...] = jnp.zeros(s_sc.shape, s_sc.dtype)
        ctx_sc[...] = jnp.zeros(ctx_sc.shape, ctx_sc.dtype)

    x = x_ref[0].astype(jnp.float32)                       # (CS, TL)
    b = b_ref[...]                                         # (CS, 9)
    w_qkvo = w_qkvo_ref[...]                               # (4*CS, CS)

    # Fused block-diagonal K/V projection for both streams: (2CS,CS)@(CS,TL).
    kv = jnp.dot(w_qkvo[CS:3 * CS], x, preferred_element_type=jnp.float32)
    k = kv[0:CS] + b[:, _BK:_BK + 1]
    v = kv[CS:2 * CS] + b[:, _BV:_BV + 1]

    # Online (rescaled) spatial softmax over L, accumulated across lane tiles.
    m_tile = jnp.max(k, axis=1, keepdims=True)             # (CS, 1)
    m_new = jnp.maximum(m_sc[...], m_tile)
    alpha = jnp.exp(m_sc[...] - m_new)
    p = jnp.exp(k - m_new)                                 # (CS, TL)
    if l_valid is not None:                                # static: L was padded
        lane = l * lane_tile + jax.lax.broadcasted_iota(
            jnp.int32, (1, lane_tile), 1)
        p = jnp.where(lane < l_valid, p, 0.0)
    s_sc[...] = alpha * s_sc[...] + jnp.sum(p, axis=1, keepdims=True)

    # ctx[j_key, i_val] += sum_l p[j, l] * v[i, l]  (rows rescaled by alpha_j)
    ctx_tile = jax.lax.dot_general(p, v, (((1,), (1,)), ((), ())),
                                   preferred_element_type=jnp.float32)
    ctx_sc[...] = alpha * ctx_sc[...] + ctx_tile
    m_sc[...] = m_new

    @pl.when(l == pl.num_programs(1) - 1)
    def _():
        # Normalize by the spatial-softmax denominator (exact divide; runs once
        # per batch element).  Transpose + head-mask happen in the wrapper.
        ctx_ref[0] = (ctx_sc[...] / s_sc[...]).astype(ctx_ref.dtype)


# ----------------------------------------------------------------------------
# Pass 2: Q softmax, ctx@Q, reprojection, stream fold, FFN, LN, grouped conv.
# Fully parallel over (B, L) — no cross-tile state.
# ----------------------------------------------------------------------------
def _fuse_pass_kernel(x_ref, ctx_ref, w_qkvo_ref, w_small_ref, hmask_ref,
                      b_ref, out_ref):
    C = IN_CH
    x = x_ref[0].astype(jnp.float32)                       # (CS, TL)
    b = b_ref[...]
    w_qkvo = w_qkvo_ref[...]

    # Fused block-diagonal Q projection for both streams.
    q = jnp.dot(w_qkvo[0:CS], x,
                preferred_element_type=jnp.float32) + b[:, _BQ:_BQ + 1]

    # Q softmax over each head's channels (per lane).  Softmax is shift-
    # invariant per lane, so one per-lane max over all stacked channels is
    # enough; per-head sums come from one block-ones (head mask) matmul.
    q_e = jnp.exp(q - jnp.max(q, axis=0, keepdims=True))
    q_s = jnp.dot(hmask_ref[...], q_e, preferred_element_type=jnp.float32)
    q_soft = q_e * pl.reciprocal(q_s, approx=True)

    # Pre-normalized, head-masked (value_ch, key_ch) context from pass 1.
    agg = jnp.dot(ctx_ref[0], q_soft, preferred_element_type=jnp.float32)

    # Block-diagonal reprojection + residual (both streams at once).
    attn = jnp.dot(w_qkvo[3 * CS:4 * CS], agg,
                   preferred_element_type=jnp.float32) + b[:, _BO:_BO + 1] + x
    add_attn = attn[0:C] + attn[C:2 * C]                   # fold rgb + flow

    # PositionwiseConv: conv1x1 -> ReLU -> conv1x1 -> +residual -> LayerNorm(C)
    h1 = jnp.maximum(
        jnp.dot(w_small_ref[0], add_attn, preferred_element_type=jnp.float32)
        + b[0:C, _B1:_B1 + 1], 0.0)
    ffn = jnp.dot(w_small_ref[1], h1,
                  preferred_element_type=jnp.float32) + b[0:C, _B2:_B2 + 1]
    y = ffn + add_attn
    # TODO(synk): v7x micro-opt — move mean/var onto the MXU via a ones-row
    #             matmul once the kernel is compute-bound there.
    mean = jnp.mean(y, axis=0, keepdims=True)
    var = jnp.mean((y - mean) ** 2, axis=0, keepdims=True)
    y = ((y - mean) * jax.lax.rsqrt(var + 1e-5)
         * b[0:C, _LN_G:_LN_G + 1] + b[0:C, _LN_B:_LN_B + 1])

    # Grouped 1x1x1 Conv3d (groups=4) as one block-diagonal matmul.
    out = jnp.dot(w_small_ref[2], y,
                  preferred_element_type=jnp.float32) + b[0:C, _BG:_BG + 1]
    out_ref[0] = out.astype(out_ref.dtype)


# ----------------------------------------------------------------------------
# Parameter packing (wrapper-side, runs once under jit)
# ----------------------------------------------------------------------------
def _block_diag2(a, b):
    za, zb = jnp.zeros_like(a), jnp.zeros_like(b)
    return jnp.concatenate(
        [jnp.concatenate([a, za], axis=1), jnp.concatenate([zb, b], axis=1)],
        axis=0)


def _pack_params(params):
    w_q = _block_diag2(params["wq_r"], params["wq_f"])
    w_k = _block_diag2(params["wk_r"], params["wk_f"])
    w_v = _block_diag2(params["wv_r"], params["wv_f"])
    w_o = _block_diag2(params["wo_r"], params["wo_f"])
    w_qkvo = jnp.concatenate([w_q, w_k, w_v, w_o], axis=0)      # (4*CS, CS)

    cout_g, cin_g = OUT_CH // GROUPS, IN_CH // GROUPS
    w_conv = jnp.zeros((OUT_CH, IN_CH), jnp.float32)
    for g in range(GROUPS):
        w_conv = w_conv.at[g * cout_g:(g + 1) * cout_g,
                           g * cin_g:(g + 1) * cin_g].set(params["wg"][g])
    w_small = jnp.stack([params["w1"], params["w2"], w_conv])   # (3, C, C)

    def pad16(v):
        return jnp.concatenate([v, jnp.zeros((CS - v.shape[0],), v.dtype)])

    b_all = jnp.stack([
        jnp.concatenate([params["bq_r"], params["bq_f"]]),
        jnp.concatenate([params["bk_r"], params["bk_f"]]),
        jnp.concatenate([params["bv_r"], params["bv_f"]]),
        jnp.concatenate([params["bo_r"], params["bo_f"]]),
        pad16(params["b1"]), pad16(params["b2"]),
        pad16(params["ln_g"]), pad16(params["ln_b"]), pad16(params["bg"]),
    ], axis=1)                                                  # (CS, 9)

    ch_head = np.arange(CS) // HK
    head_mask = jnp.asarray(
        (ch_head[:, None] == ch_head[None, :]).astype(np.float32))  # (CS, CS)
    return w_qkvo, w_small, b_all, head_mask


def _round_up(x, m):
    return (x + m - 1) // m * m


# ----------------------------------------------------------------------------
# Wrapper
# ----------------------------------------------------------------------------
@functools.partial(jax.jit, static_argnames=("lane_tile",))
def resnet_attn_forward(x_rgb, x_flow, params, *, lane_tile=2048):
    """x_rgb / x_flow: (B, C, T, H, W) float32 -> out: (B, OUT_CH, T, H, W)."""
    B, C, T, H, W = x_rgb.shape
    assert C == IN_CH
    assert lane_tile % 128 == 0
    L = T * H * W

    tl = min(lane_tile, _round_up(L, 128))       # lane tile (multiple of 128)
    L_pad = _round_up(L, tl)
    nL = L_pad // tl

    # Stack rgb+flow on sublanes (16 rows = one bf16 vreg), pad L so every
    # stream is lane-dense, and ship activations HBM<->VMEM in bf16.
    x = jnp.concatenate([x_rgb.reshape(B, C, L), x_flow.reshape(B, C, L)],
                        axis=1)
    if L_pad != L:
        x = jnp.pad(x, ((0, 0), (0, 0), (0, L_pad - L)))
    x = x.astype(jnp.bfloat16)

    w_qkvo, w_small, b_all, head_mask = _pack_params(params)

    def full_spec(a):
        nd = a.ndim
        return pl.BlockSpec(a.shape, lambda b, l, _nd=nd: (0,) * _nd)

    # ---- Pass 1: per-batch (key_ch, value_ch) context (reduction over L) ----
    ctx = pl.pallas_call(
        functools.partial(_ctx_pass_kernel,
                          l_valid=(L if L_pad != L else None), lane_tile=tl),
        out_shape=jax.ShapeDtypeStruct((B, CS, CS), jnp.float32),
        grid=(B, nL),
        in_specs=[
            pl.BlockSpec((1, CS, tl), lambda b, l: (b, 0, l)),
            full_spec(w_qkvo), full_spec(b_all),
        ],
        out_specs=pl.BlockSpec((1, CS, CS), lambda b, l: (b, 0, 0)),
        scratch_shapes=[
            pltpu.VMEM((CS, 1), jnp.float32),     # running spatial max
            pltpu.VMEM((CS, 1), jnp.float32),     # running exp-sum
            pltpu.VMEM((CS, CS), jnp.float32),    # running raw context
        ],
        compiler_params=pltpu.CompilerParams(
            dimension_semantics=("parallel", "arbitrary"),
            vmem_limit_bytes=_VMEM_LIMIT),
        cost_estimate=pl.CostEstimate(
            flops=B * L_pad * (2 * (2 * CS) * CS + 2 * CS * CS),
            transcendentals=B * L_pad * CS,
            bytes_accessed=2 * B * CS * L_pad + 4 * B * CS * CS),
    )(x, w_qkvo, b_all)

    # (key_ch, value_ch) -> (value_ch, key_ch), head mask applied once per
    # batch element here instead of once per L tile in the kernel.
    ctx_bd = jnp.swapaxes(ctx, 1, 2) * head_mask[None]

    # ---- Pass 2: everything after the context; parallel over B and L -------
    out = pl.pallas_call(
        _fuse_pass_kernel,
        out_shape=jax.ShapeDtypeStruct((B, OUT_CH, L_pad), jnp.float32),
        grid=(B, nL),
        in_specs=[
            pl.BlockSpec((1, CS, tl), lambda b, l: (b, 0, l)),
            pl.BlockSpec((1, CS, CS), lambda b, l: (b, 0, 0)),
            full_spec(w_qkvo), full_spec(w_small), full_spec(head_mask),
            full_spec(b_all),
        ],
        out_specs=pl.BlockSpec((1, OUT_CH, tl), lambda b, l: (b, 0, l)),
        compiler_params=pltpu.CompilerParams(
            dimension_semantics=("parallel", "parallel"),
            vmem_limit_bytes=_VMEM_LIMIT),
        cost_estimate=pl.CostEstimate(
            flops=B * L_pad * (8 * CS * CS + 6 * IN_CH * IN_CH),
            transcendentals=B * L_pad * (2 * CS + IN_CH),
            bytes_accessed=2 * B * CS * L_pad + 4 * B * OUT_CH * L_pad),
    )(x, ctx_bd, w_qkvo, w_small, head_mask, b_all)

    if L_pad != L:
        out = out[:, :, :L]
    return out.reshape(B, OUT_CH, T, H, W)


# ----------------------------------------------------------------------------
# Pure-JAX reference (direct per-head translation of the module) for checking
# ----------------------------------------------------------------------------
def _ref_attention(x, wq, bq, wk, bk, wv, bv, wo, bo, n_heads):
    C, _ = x.shape
    q = wq @ x + bq[:, None]
    k = wk @ x + bk[:, None]
    v = wv @ x + bv[:, None]
    hk = C // n_heads
    heads = []
    for h in range(n_heads):
        sl = slice(h * hk, (h + 1) * hk)
        k_h = jax.nn.softmax(k[sl], axis=1)   # softmax over spatial
        q_h = jax.nn.softmax(q[sl], axis=0)   # softmax over head channels
        v_h = v[sl]
        ctx = k_h @ v_h.T                     # (hk, hv)
        heads.append(ctx.T @ q_h)             # (hv, L)
    agg = jnp.concatenate(heads, axis=0)
    return wo @ agg + bo[:, None] + x


def _ref_forward(x_rgb, x_flow, params):
    B, C, T, H, W = x_rgb.shape
    L = T * H * W
    xr = x_rgb.reshape(B, C, L)
    xf = x_flow.reshape(B, C, L)

    def one(xr_b, xf_b):
        r = _ref_attention(xr_b, params["wq_r"], params["bq_r"],
                           params["wk_r"], params["bk_r"],
                           params["wv_r"], params["bv_r"],
                           params["wo_r"], params["bo_r"], N_HEADS)
        f = _ref_attention(xf_b, params["wq_f"], params["bq_f"],
                           params["wk_f"], params["bk_f"],
                           params["wv_f"], params["bv_f"],
                           params["wo_f"], params["bo_f"], N_HEADS)
        a = r + f
        h1 = jnp.maximum(params["w1"] @ a + params["b1"][:, None], 0.0)
        y = params["w2"] @ h1 + params["b2"][:, None] + a
        mean = jnp.mean(y, axis=0, keepdims=True)
        var = jnp.mean((y - mean) ** 2, axis=0, keepdims=True)
        y = ((y - mean) * jax.lax.rsqrt(var + 1e-5)
             * params["ln_g"][:, None] + params["ln_b"][:, None])
        cin_g = IN_CH // GROUPS
        outs = [params["wg"][g] @ y[g * cin_g:(g + 1) * cin_g]
                for g in range(GROUPS)]
        return jnp.concatenate(outs, axis=0) + params["bg"][:, None]

    out = jax.vmap(one)(xr, xf)
    return out.reshape(B, OUT_CH, T, H, W)


# ----------------------------------------------------------------------------
# Deterministic parameter init (PyTorch Conv 1x1 convention: W (C_out, C_in))
# ----------------------------------------------------------------------------
def make_params(key):
    keys = jax.random.split(key, 32)
    ki = iter(keys)

    def w(shape, scale=0.1):
        return (scale * jax.random.normal(next(ki), shape)).astype(jnp.float32)

    p = {}
    for tag in ("r", "f"):
        for name in ("q", "k", "v", "o"):
            p[f"w{name}_{tag}"] = w((IN_CH, IN_CH))
            p[f"b{name}_{tag}"] = w((IN_CH,), 0.01)
    p["w1"] = w((IN_CH, IN_CH))
    p["b1"] = w((IN_CH,), 0.01)
    p["w2"] = w((IN_CH, IN_CH))
    p["b2"] = w((IN_CH,), 0.01)
    p["ln_g"] = jnp.ones((IN_CH,), jnp.float32)
    p["ln_b"] = jnp.zeros((IN_CH,), jnp.float32)
    p["wg"] = w((GROUPS, OUT_CH // GROUPS, IN_CH // GROUPS))
    p["bg"] = w((OUT_CH,), 0.01)
    return p


if __name__ == "__main__":
    key = jax.random.PRNGKey(0)
    k1, k2, k3 = jax.random.split(key, 3)
    params = make_params(k3)

    # Case 1: I3D-style L = 4*7*7 = 196 (not a multiple of 128) -> padded to
    # 256, 2 lane tiles; exercises the online cross-tile K-softmax / context
    # accumulation and the lane-padding path.
    B, C, T, H, W = 2, IN_CH, 4, 7, 7
    x_rgb = jax.random.normal(k1, (B, C, T, H, W), dtype=jnp.float32)
    x_flow = jax.random.normal(k2, (B, C, T, H, W), dtype=jnp.float32)

    out = jax.block_until_ready(
        resnet_attn_forward(x_rgb, x_flow, params, lane_tile=128))

    # Reference sees the same bf16-rounded activations the kernel streams.
    xr_b = x_rgb.astype(jnp.bfloat16).astype(jnp.float32)
    xf_b = x_flow.astype(jnp.bfloat16).astype(jnp.float32)
    ref = jax.block_until_ready(_ref_forward(xr_b, xf_b, params))

    assert out.shape == (B, OUT_CH, T, H, W), out.shape
    err1 = float(jnp.max(jnp.abs(out - ref)))
    assert jnp.allclose(out, ref, atol=2e-3, rtol=2e-3), (
        f"case1 mismatch vs JAX reference, max abs err = {err1}")

    # Case 2: L = 2*8*8 = 128, single lane tile, no padding.
    T2, H2, W2 = 2, 8, 8
    x_rgb2 = jax.random.normal(k1, (B, C, T2, H2, W2), dtype=jnp.float32)
    x_flow2 = jax.random.normal(k2, (B, C, T2, H2, W2), dtype=jnp.float32)
    out2 = jax.block_until_ready(resnet_attn_forward(x_rgb2, x_flow2, params))
    ref2 = _ref_forward(x_rgb2.astype(jnp.bfloat16).astype(jnp.float32),
                        x_flow2.astype(jnp.bfloat16).astype(jnp.float32),
                        params)
    err2 = float(jnp.max(jnp.abs(out2 - ref2)))
    assert jnp.allclose(out2, ref2, atol=2e-3, rtol=2e-3), (
        f"case2 mismatch vs JAX reference, max abs err = {err2}")

    print("KERNEL_OK")
</pallas_src>

<mosaic_0001>
module attributes {stable_mosaic.version = 11 : i64} {
  func.func @_ctx_pass_kernel(%arg0: i32, %arg1: i32, %arg2: memref<1x16x128xbf16, #tpu.memory_space<vmem>>, %arg3: memref<64x16xf32, #tpu.memory_space<vmem>>, %arg4: memref<16x9xf32, #tpu.memory_space<vmem>>, %arg5: memref<1x16x16xf32, #tpu.memory_space<vmem>>, %arg6: memref<16x1xf32, #tpu.memory_space<vmem>>, %arg7: memref<16x1xf32, #tpu.memory_space<vmem>>, %arg8: memref<16x16xf32, #tpu.memory_space<vmem>>) attributes {dimension_semantics = [#tpu.dimension_semantics<parallel>, #tpu.dimension_semantics<arbitrary>], iteration_bounds = array<i64: 2, 2>, scalar_prefetch = 0 : i64, scratch_operands = 3 : i64, tpu.core_type = #tpu.core_type<tc>, window_params = [{transform_indices = @transform_0, window_bounds = array<i64: 1, 16, 128>}, {pipeline_mode = #tpu.pipeline_mode<synchronous>, transform_indices = @transform_1, window_bounds = array<i64: 64, 16>}, {pipeline_mode = #tpu.pipeline_mode<synchronous>, transform_indices = @transform_2, window_bounds = array<i64: 16, 9>}, {transform_indices = @transform_3, window_bounds = array<i64: 1, 16, 16>}]} {
    %c0_i32 = arith.constant 0 : i32
    %0 = arith.cmpi eq, %arg1, %c0_i32 : i32
    %1 = arith.extui %0 : i1 to i32
    %c0_i32_0 = arith.constant 0 : i32
    %2 = arith.cmpi ne, %1, %c0_i32_0 : i32
    scf.if %2 {
      %cst_26 = arith.constant 0xFF800000 : f32
      %54 = vector.broadcast %cst_26 : f32 to vector<16x1xf32>
      %c0_27 = arith.constant 0 : index
      %c0_28 = arith.constant 0 : index
      %55 = vector.load %arg6[%c0_27, %c0_28] : memref<16x1xf32, #tpu.memory_space<vmem>>, vector<16x1xf32>
      tpu.vector_store %arg6[%c0_27, %c0_28], %54 {strides = array<i32>} : memref<16x1xf32, #tpu.memory_space<vmem>>, vector<16x1xf32>,
      %cst_29 = arith.constant 0.000000e+00 : f32
      %56 = vector.broadcast %cst_29 : f32 to vector<16x1xf32>
      %c0_30 = arith.constant 0 : index
      %c0_31 = arith.constant 0 : index
      %57 = vector.load %arg7[%c0_30, %c0_31] : memref<16x1xf32, #tpu.memory_space<vmem>>, vector<16x1xf32>
      tpu.vector_store %arg7[%c0_30, %c0_31], %56 {strides = array<i32>} : memref<16x1xf32, #tpu.memory_space<vmem>>, vector<16x1xf32>,
      %cst_32 = arith.constant 0.000000e+00 : f32
      %58 = vector.broadcast %cst_32 : f32 to vector<16x16xf32>
      %c0_33 = arith.constant 0 : index
      %c0_34 = arith.constant 0 : index
      %59 = vector.load %arg8[%c0_33, %c0_34] : memref<16x16xf32, #tpu.memory_space<vmem>>, vector<16x16xf32>
      tpu.vector_store %arg8[%c0_33, %c0_34], %58 {strides = array<i32>} : memref<16x16xf32, #tpu.memory_space<vmem>>, vector<16x16xf32>,
    } else {
    }
    %c0 = arith.constant 0 : index
    %c0_1 = arith.constant 0 : index
    %c0_2 = arith.constant 0 : index
    %3 = vector.load %arg2[%c0, %c0_1, %c0_2] : memref<1x16x128xbf16, #tpu.memory_space<vmem>>, vector<1x16x128xbf16>
    %4 = vector.shape_cast %3 : vector<1x16x128xbf16> to vector<16x128xbf16>
    %5 = arith.extf %4 : vector<16x128xbf16> to vector<16x128xf32>
    %c0_3 = arith.constant 0 : index
    %c0_4 = arith.constant 0 : index
    %6 = vector.load %arg4[%c0_3, %c0_4] : memref<16x9xf32, #tpu.memory_space<vmem>>, vector<16x9xf32>
    %c0_5 = arith.constant 0 : index
    %c0_6 = arith.constant 0 : index
    %7 = vector.load %arg3[%c0_5, %c0_6] : memref<64x16xf32, #tpu.memory_space<vmem>>, vector<64x16xf32>
    %8 = vector.extract_strided_slice %7 {offsets = [16, 0], sizes = [32, 16], strides = [1, 1]} : vector<64x16xf32> to vector<32x16xf32>
    %cst = arith.constant dense<0.000000e+00> : vector<32x128xf32>
    %9 = tpu.matmul %8, %5, %cst {dimension_numbers = #tpu.dot_dimension_numbers<[1], [0], [0], [1], [0, 0, 1, 1], [], []>} : vector<32x16xf32>, vector<16x128xf32>, vector<32x128xf32> -> vector<32x128xf32>
    %10 = vector.extract_strided_slice %9 {offsets = [0, 0], sizes = [16, 128], strides = [1, 1]} : vector<32x128xf32> to vector<16x128xf32>
    %11 = vector.extract_strided_slice %6 {offsets = [0, 1], sizes = [16, 1], strides = [1, 1]} : vector<16x9xf32> to vector<16x1xf32>
    %12 = vector.broadcast %11 : vector<16x1xf32> to vector<16x128xf32>
    %13 = arith.addf %10, %12 : vector<16x128xf32>
    %14 = vector.extract_strided_slice %9 {offsets = [16, 0], sizes = [16, 128], strides = [1, 1]} : vector<32x128xf32> to vector<16x128xf32>
    %15 = vector.extract_strided_slice %6 {offsets = [0, 2], sizes = [16, 1], strides = [1, 1]} : vector<16x9xf32> to vector<16x1xf32>
    %16 = vector.broadcast %15 : vector<16x1xf32> to vector<16x128xf32>
    %17 = arith.addf %14, %16 : vector<16x128xf32>
    %cst_7 = arith.constant dense<0xFF800000> : vector<16xf32>
    %18 = vector.multi_reduction <maximumf>, %13, %cst_7 [1] : vector<16x128xf32> to vector<16xf32>
    %19 = vector.shape_cast %18 : vector<16xf32> to vector<16x1xf32>
    %c0_8 = arith.constant 0 : index
    %c0_9 = arith.constant 0 : index
    %20 = vector.load %arg6[%c0_8, %c0_9] : memref<16x1xf32, #tpu.memory_space<vmem>>, vector<16x1xf32>
    %21 = arith.maximumf %20, %19 : vector<16x1xf32>
    %c0_10 = arith.constant 0 : index
    %c0_11 = arith.constant 0 : index
    %22 = vector.load %arg6[%c0_10, %c0_11] : memref<16x1xf32, #tpu.memory_space<vmem>>, vector<16x1xf32>
    %23 = arith.subf %22, %21 : vector<16x1xf32>
    %24 = math.exp %23 : vector<16x1xf32>
    %25 = vector.broadcast %21 : vector<16x1xf32> to vector<16x128xf32>
    %26 = arith.subf %13, %25 : vector<16x128xf32>
    %27 = math.exp %26 : vector<16x128xf32>
    %c128_i32 = arith.constant 128 : i32
    %28 = arith.muli %arg1, %c128_i32 : i32
    %29 = tpu.iota {dimensions = array<i32: 1>} : vector<1x128xi32>
    %30 = vector.broadcast %28 : i32 to vector<1x128xi32>
    %31 = arith.addi %30, %29 : vector<1x128xi32>
    %c196_i32 = arith.constant 196 : i32
    %32 = vector.broadcast %c196_i32 : i32 to vector<1x128xi32>
    %33 = arith.cmpi slt, %31, %32 : vector<1x128xi32>
    %cst_12 = arith.constant 0.000000e+00 : f32
    %34 = vector.shape_cast %33 : vector<1x128xi1> to vector<1x128xi1>
    %35 = vector.broadcast %34 : vector<1x128xi1> to vector<16x128xi1>
    %36 = vector.broadcast %cst_12 : f32 to vector<16x128xf32>
    %37 = arith.select %35, %27, %36 : vector<16x128xi1>, vector<16x128xf32>
    %c0_13 = arith.constant 0 : index
    %c0_14 = arith.constant 0 : index
    %38 = vector.load %arg7[%c0_13, %c0_14] : memref<16x1xf32, #tpu.memory_space<vmem>>, vector<16x1xf32>
    %39 = arith.mulf %24, %38 : vector<16x1xf32>
    %cst_15 = arith.constant dense<0.000000e+00> : vector<16xf32>
    %40 = vector.multi_reduction <add>, %37, %cst_15 [1] : vector<16x128xf32> to vector<16xf32>
    %41 = vector.shape_cast %40 : vector<16xf32> to vector<16x1xf32>
    %42 = arith.addf %39, %41 : vector<16x1xf32>
    %c0_16 = arith.constant 0 : index
    %c0_17 = arith.constant 0 : index
    %43 = vector.load %arg7[%c0_16, %c0_17] : memref<16x1xf32, #tpu.memory_space<vmem>>, vector<16x1xf32>
    tpu.vector_store %arg7[%c0_16, %c0_17], %42 {strides = array<i32>} : memref<16x1xf32, #tpu.memory_space<vmem>>, vector<16x1xf32>,
    %cst_18 = arith.constant dense<0.000000e+00> : vector<16x16xf32>
    %44 = tpu.matmul %37, %17, %cst_18 {dimension_numbers = #tpu.dot_dimension_numbers<[1], [1], [0], [0], [0, 0, 1, 0], [], []>} : vector<16x128xf32>, vector<16x128xf32>, vector<16x16xf32> -> vector<16x16xf32>
    %c0_19 = arith.constant 0 : index
    %c0_20 = arith.constant 0 : index
    %45 = vector.load %arg8[%c0_19, %c0_20] : memref<16x16xf32, #tpu.memory_space<vmem>>, vector<16x16xf32>
    %46 = vector.broadcast %24 : vector<16x1xf32> to vector<16x16xf32>
    %47 = arith.mulf %46, %45 : vector<16x16xf32>
    %48 = arith.addf %47, %44 : vector<16x16xf32>
    %c0_21 = arith.constant 0 : index
    %c0_22 = arith.constant 0 : index
    %49 = vector.load %arg8[%c0_21, %c0_22] : memref<16x16xf32, #tpu.memory_space<vmem>>, vector<16x16xf32>
    tpu.vector_store %arg8[%c0_21, %c0_22], %48 {strides = array<i32>} : memref<16x16xf32, #tpu.memory_space<vmem>>, vector<16x16xf32>,
    %c0_23 = arith.constant 0 : index
    %c0_24 = arith.constant 0 : index
    %50 = vector.load %arg6[%c0_23, %c0_24] : memref<16x1xf32, #tpu.memory_space<vmem>>, vector<16x1xf32>
    tpu.vector_store %arg6[%c0_23, %c0_24], %21 {strides = array<i32>} : memref<16x1xf32, #tpu.memory_space<vmem>>, vector<16x1xf32>,
    %c1_i32 = arith.constant 1 : i32
    %51 = arith.cmpi eq, %arg1, %c1_i32 : i32
    %52 = arith.extui %51 : i1 to i32
    %c0_i32_25 = arith.constant 0 : i32
    %53 = arith.cmpi ne, %52, %c0_i32_25 : i32
    scf.if %53 {
      %c0_26 = arith.constant 0 : index
      %c0_27 = arith.constant 0 : index
      %54 = vector.load %arg8[%c0_26, %c0_27] : memref<16x16xf32, #tpu.memory_space<vmem>>, vector<16x16xf32>
      %c0_28 = arith.constant 0 : index
      %c0_29 = arith.constant 0 : index
      %55 = vector.load %arg7[%c0_28, %c0_29] : memref<16x1xf32, #tpu.memory_space<vmem>>, vector<16x1xf32>
      %56 = vector.broadcast %55 : vector<16x1xf32> to vector<16x16xf32>
      %57 = arith.divf %54, %56 : vector<16x16xf32>
      %c0_30 = arith.constant 0 : index
      %c0_31 = arith.constant 0 : index
      %c0_32 = arith.constant 0 : index
      %58 = vector.load %arg5[%c0_30, %c0_31, %c0_32] : memref<1x16x16xf32, #tpu.memory_space<vmem>>, vector<1x16x16xf32>
      %59 = vector.shape_cast %58 : vector<1x16x16xf32> to vector<16x16xf32>
      %60 = vector.shape_cast %57 : vector<16x16xf32> to vector<1x16x16xf32>
      tpu.vector_store %arg5[%c0_30, %c0_31, %c0_32], %60 {strides = array<i32>} : memref<1x16x16xf32, #tpu.memory_space<vmem>>, vector<1x16x16xf32>,
    } else {
    }
    return
  }
  func.func @transform_0(%arg0: i32, %arg1: i32) -> (i32, i32, i32) {
    %c0_i32 = arith.constant 0 : i32
    %c0_i32_0 = arith.constant 0 : i32
    return %arg0, %c0_i32, %arg1 : i32, i32, i32
  }
  func.func @transform_1(%arg0: i32, %arg1: i32) -> (i32, i32) {
    %c0_i32 = arith.constant 0 : i32
    %c0_i32_0 = arith.constant 0 : i32
    %c0_i32_1 = arith.constant 0 : i32
    return %c0_i32, %c0_i32_0 : i32, i32
  }
  func.func @transform_2(%arg0: i32, %arg1: i32) -> (i32, i32) {
    %c0_i32 = arith.constant 0 : i32
    %c0_i32_0 = arith.constant 0 : i32
    %c0_i32_1 = arith.constant 0 : i32
    return %c0_i32, %c0_i32_0 : i32, i32
  }
  func.func @transform_3(%arg0: i32, %arg1: i32) -> (i32, i32, i32) {
    %c0_i32 = arith.constant 0 : i32
    %c0_i32_0 = arith.constant 0 : i32
    %c0_i32_1 = arith.constant 0 : i32
    return %arg0, %c0_i32, %c0_i32_0 : i32, i32, i32
  }
}

module attributes {stable_mosaic.version = 11 : i64} {
  func.func @_fuse_pass_kernel(%arg0: i32, %arg1: i32, %arg2: memref<1x16x128xbf16, #tpu.memory_space<vmem>>, %arg3: memref<1x16x16xf32, #tpu.memory_space<vmem>>, %arg4: memref<64x16xf32, #tpu.memory_space<vmem>>, %arg5: memref<3x8x8xf32, #tpu.memory_space<vmem>>, %arg6: memref<16x16xf32, #tpu.memory_space<vmem>>, %arg7: memref<16x9xf32, #tpu.memory_space<vmem>>, %arg8: memref<1x8x128xf32, #tpu.memory_space<vmem>>) attributes {dimension_semantics = [#tpu.dimension_semantics<parallel>, #tpu.dimension_semantics<parallel>], iteration_bounds = array<i64: 2, 2>, scalar_prefetch = 0 : i64, scratch_operands = 0 : i64, tpu.core_type = #tpu.core_type<tc>, window_params = [{transform_indices = @transform_0, window_bounds = array<i64: 1, 16, 128>}, {transform_indices = @transform_1, window_bounds = array<i64: 1, 16, 16>}, {pipeline_mode = #tpu.pipeline_mode<synchronous>, transform_indices = @transform_2, window_bounds = array<i64: 64, 16>}, {pipeline_mode = #tpu.pipeline_mode<synchronous>, transform_indices = @transform_3, window_bounds = array<i64: 3, 8, 8>}, {pipeline_mode = #tpu.pipeline_mode<synchronous>, transform_indices = @transform_4, window_bounds = array<i64: 16, 16>}, {pipeline_mode = #tpu.pipeline_mode<synchronous>, transform_indices = @transform_5, window_bounds = array<i64: 16, 9>}, {transform_indices = @transform_6, window_bounds = array<i64: 1, 8, 128>}]} {
    %c0 = arith.constant 0 : index
    %c0_0 = arith.constant 0 : index
    %c0_1 = arith.constant 0 : index
    %0 = vector.load %arg2[%c0, %c0_0, %c0_1] : memref<1x16x128xbf16, #tpu.memory_space<vmem>>, vector<1x16x128xbf16>
    %1 = vector.shape_cast %0 : vector<1x16x128xbf16> to vector<16x128xbf16>
    %2 = arith.extf %1 : vector<16x128xbf16> to vector<16x128xf32>
    %c0_2 = arith.constant 0 : index
    %c0_3 = arith.constant 0 : index
    %3 = vector.load %arg7[%c0_2, %c0_3] : memref<16x9xf32, #tpu.memory_space<vmem>>, vector<16x9xf32>
    %c0_4 = arith.constant 0 : index
    %c0_5 = arith.constant 0 : index
    %4 = vector.load %arg4[%c0_4, %c0_5] : memref<64x16xf32, #tpu.memory_space<vmem>>, vector<64x16xf32>
    %5 = vector.extract_strided_slice %4 {offsets = [0, 0], sizes = [16, 16], strides = [1, 1]} : vector<64x16xf32> to vector<16x16xf32>
    %cst = arith.constant dense<0.000000e+00> : vector<16x128xf32>
    %6 = tpu.matmul %5, %2, %cst {dimension_numbers = #tpu.dot_dimension_numbers<[1], [0], [0], [1], [0, 0, 1, 1], [], []>} : vector<16x16xf32>, vector<16x128xf32>, vector<16x128xf32> -> vector<16x128xf32>
    %7 = vector.extract_strided_slice %3 {offsets = [0, 0], sizes = [16, 1], strides = [1, 1]} : vector<16x9xf32> to vector<16x1xf32>
    %8 = vector.broadcast %7 : vector<16x1xf32> to vector<16x128xf32>
    %9 = arith.addf %6, %8 : vector<16x128xf32>
    %cst_6 = arith.constant dense<0xFF800000> : vector<128xf32>
    %10 = vector.multi_reduction <maximumf>, %9, %cst_6 [0] : vector<16x128xf32> to vector<128xf32>
    %11 = vector.shape_cast %10 : vector<128xf32> to vector<1x128xf32>
    %12 = vector.broadcast %11 : vector<1x128xf32> to vector<16x128xf32>
    %13 = arith.subf %9, %12 : vector<16x128xf32>
    %14 = math.exp %13 : vector<16x128xf32>
    %c0_7 = arith.constant 0 : index
    %c0_8 = arith.constant 0 : index
    %15 = vector.load %arg6[%c0_7, %c0_8] : memref<16x16xf32, #tpu.memory_space<vmem>>, vector<16x16xf32>
    %cst_9 = arith.constant dense<0.000000e+00> : vector<16x128xf32>
    %16 = tpu.matmul %15, %14, %cst_9 {dimension_numbers = #tpu.dot_dimension_numbers<[1], [0], [0], [1], [0, 0, 1, 1], [], []>} : vector<16x16xf32>, vector<16x128xf32>, vector<16x128xf32> -> vector<16x128xf32>
    %17 = tpu.reciprocal %16 {approx = true} : vector<16x128xf32> -> vector<16x128xf32>
    %18 = arith.mulf %14, %17 : vector<16x128xf32>
    %c0_10 = arith.constant 0 : index
    %c0_11 = arith.constant 0 : index
    %c0_12 = arith.constant 0 : index
    %19 = vector.load %arg3[%c0_10, %c0_11, %c0_12] : memref<1x16x16xf32, #tpu.memory_space<vmem>>, vector<1x16x16xf32>
    %20 = vector.shape_cast %19 : vector<1x16x16xf32> to vector<16x16xf32>
    %cst_13 = arith.constant dense<0.000000e+00> : vector<16x128xf32>
    %21 = tpu.matmul %20, %18, %cst_13 {dimension_numbers = #tpu.dot_dimension_numbers<[1], [0], [0], [1], [0, 0, 1, 1], [], []>} : vector<16x16xf32>, vector<16x128xf32>, vector<16x128xf32> -> vector<16x128xf32>
    %22 = vector.extract_strided_slice %4 {offsets = [48, 0], sizes = [16, 16], strides = [1, 1]} : vector<64x16xf32> to vector<16x16xf32>
    %cst_14 = arith.constant dense<0.000000e+00> : vector<16x128xf32>
    %23 = tpu.matmul %22, %21, %cst_14 {dimension_numbers = #tpu.dot_dimension_numbers<[1], [0], [0], [1], [0, 0, 1, 1], [], []>} : vector<16x16xf32>, vector<16x128xf32>, vector<16x128xf32> -> vector<16x128xf32>
    %24 = vector.extract_strided_slice %3 {offsets = [0, 3], sizes = [16, 1], strides = [1, 1]} : vector<16x9xf32> to vector<16x1xf32>
    %25 = vector.broadcast %24 : vector<16x1xf32> to vector<16x128xf32>
    %26 = arith.addf %23, %25 : vector<16x128xf32>
    %27 = arith.addf %26, %2 : vector<16x128xf32>
    %28 = vector.extract_strided_slice %27 {offsets = [0, 0], sizes = [8, 128], strides = [1, 1]} : vector<16x128xf32> to vector<8x128xf32>
    %29 = vector.extract_strided_slice %27 {offsets = [8, 0], sizes = [8, 128], strides = [1, 1]} : vector<16x128xf32> to vector<8x128xf32>
    %30 = arith.addf %28, %29 : vector<8x128xf32>
    %c0_15 = arith.constant 0 : index
    %c0_16 = arith.constant 0 : index
    %c0_17 = arith.constant 0 : index
    %31 = vector.load %arg5[%c0_15, %c0_16, %c0_17] : memref<3x8x8xf32, #tpu.memory_space<vmem>>, vector<1x8x8xf32>
    %32 = vector.shape_cast %31 : vector<1x8x8xf32> to vector<8x8xf32>
    %cst_18 = arith.constant dense<0.000000e+00> : vector<8x128xf32>
    %33 = tpu.matmul %32, %30, %cst_18 {dimension_numbers = #tpu.dot_dimension_numbers<[1], [0], [0], [1], [0, 0, 1, 1], [], []>} : vector<8x8xf32>, vector<8x128xf32>, vector<8x128xf32> -> vector<8x128xf32>
    %34 = vector.extract_strided_slice %3 {offsets = [0, 4], sizes = [8, 1], strides = [1, 1]} : vector<16x9xf32> to vector<8x1xf32>
    %35 = vector.broadcast %34 : vector<8x1xf32> to vector<8x128xf32>
    %36 = arith.addf %33, %35 : vector<8x128xf32>
    %cst_19 = arith.constant 0.000000e+00 : f32
    %37 = vector.broadcast %cst_19 : f32 to vector<8x128xf32>
    %38 = arith.maximumf %36, %37 : vector<8x128xf32>
    %c1 = arith.constant 1 : index
    %c0_20 = arith.constant 0 : index
    %c0_21 = arith.constant 0 : index
    %39 = vector.load %arg5[%c1, %c0_20, %c0_21] : memref<3x8x8xf32, #tpu.memory_space<vmem>>, vector<1x8x8xf32>
    %40 = vector.shape_cast %39 : vector<1x8x8xf32> to vector<8x8xf32>
    %cst_22 = arith.constant dense<0.000000e+00> : vector<8x128xf32>
    %41 = tpu.matmul %40, %38, %cst_22 {dimension_numbers = #tpu.dot_dimension_numbers<[1], [0], [0], [1], [0, 0, 1, 1], [], []>} : vector<8x8xf32>, vector<8x128xf32>, vector<8x128xf32> -> vector<8x128xf32>
    %42 = vector.extract_strided_slice %3 {offsets = [0, 5], sizes = [8, 1], strides = [1, 1]} : vector<16x9xf32> to vector<8x1xf32>
    %43 = vector.broadcast %42 : vector<8x1xf32> to vector<8x128xf32>
    %44 = arith.addf %41, %43 : vector<8x128xf32>
    %45 = arith.addf %44, %30 : vector<8x128xf32>
    %cst_23 = arith.constant dense<0.000000e+00> : vector<128xf32>
    %46 = vector.multi_reduction <add>, %45, %cst_23 [0] : vector<8x128xf32> to vector<128xf32>
    %47 = vector.shape_cast %46 : vector<128xf32> to vector<1x128xf32>
    %cst_24 = arith.constant 8.000000e+00 : f32
    %48 = vector.broadcast %cst_24 : f32 to vector<1x128xf32>
    %49 = arith.divf %47, %48 : vector<1x128xf32>
    %50 = vector.broadcast %49 : vector<1x128xf32> to vector<8x128xf32>
    %51 = arith.subf %45, %50 : vector<8x128xf32>
    %52 = arith.mulf %51, %51 : vector<8x128xf32>
    %cst_25 = arith.constant dense<0.000000e+00> : vector<128xf32>
    %53 = vector.multi_reduction <add>, %52, %cst_25 [0] : vector<8x128xf32> to vector<128xf32>
    %54 = vector.shape_cast %53 : vector<128xf32> to vector<1x128xf32>
    %cst_26 = arith.constant 8.000000e+00 : f32
    %55 = vector.broadcast %cst_26 : f32 to vector<1x128xf32>
    %56 = arith.divf %54, %55 : vector<1x128xf32>
    %57 = vector.broadcast %49 : vector<1x128xf32> to vector<8x128xf32>
    %58 = arith.subf %45, %57 : vector<8x128xf32>
    %cst_27 = arith.constant 9.99999974E-6 : f32
    %59 = vector.broadcast %cst_27 : f32 to vector<1x128xf32>
    %60 = arith.addf %56, %59 : vector<1x128xf32>
    %61 = math.rsqrt %60 : vector<1x128xf32>
    %62 = vector.broadcast %61 : vector<1x128xf32> to vector<8x128xf32>
    %63 = arith.mulf %58, %62 : vector<8x128xf32>
    %64 = vector.extract_strided_slice %3 {offsets = [0, 6], sizes = [8, 1], strides = [1, 1]} : vector<16x9xf32> to vector<8x1xf32>
    %65 = vector.broadcast %64 : vector<8x1xf32> to vector<8x128xf32>
    %66 = arith.mulf %63, %65 : vector<8x128xf32>
    %67 = vector.extract_strided_slice %3 {offsets = [0, 7], sizes = [8, 1], strides = [1, 1]} : vector<16x9xf32> to vector<8x1xf32>
    %68 = vector.broadcast %67 : vector<8x1xf32> to vector<8x128xf32>
    %69 = arith.addf %66, %68 : vector<8x128xf32>
    %c2 = arith.constant 2 : index
    %c0_28 = arith.constant 0 : index
    %c0_29 = arith.constant 0 : index
    %70 = vector.load %arg5[%c2, %c0_28, %c0_29] : memref<3x8x8xf32, #tpu.memory_space<vmem>>, vector<1x8x8xf32>
    %71 = vector.shape_cast %70 : vector<1x8x8xf32> to vector<8x8xf32>
    %cst_30 = arith.constant dense<0.000000e+00> : vector<8x128xf32>
    %72 = tpu.matmul %71, %69, %cst_30 {dimension_numbers = #tpu.dot_dimension_numbers<[1], [0], [0], [1], [0, 0, 1, 1], [], []>} : vector<8x8xf32>, vector<8x128xf32>, vector<8x128xf32> -> vector<8x128xf32>
    %73 = vector.extract_strided_slice %3 {offsets = [0, 8], sizes = [8, 1], strides = [1, 1]} : vector<16x9xf32> to vector<8x1xf32>
    %74 = vector.broadcast %73 : vector<8x1xf32> to vector<8x128xf32>
    %75 = arith.addf %72, %74 : vector<8x128xf32>
    %c0_31 = arith.constant 0 : index
    %c0_32 = arith.constant 0 : index
    %c0_33 = arith.constant 0 : index
    %76 = vector.load %arg8[%c0_31, %c0_32, %c0_33] : memref<1x8x128xf32, #tpu.memory_space<vmem>>, vector<1x8x128xf32>
    %77 = vector.shape_cast %76 : vector<1x8x128xf32> to vector<8x128xf32>
    %78 = vector.shape_cast %75 : vector<8x128xf32> to vector<1x8x128xf32>
    tpu.vector_store %arg8[%c0_31, %c0_32, %c0_33], %78 {strides = array<i32>} : memref<1x8x128xf32, #tpu.memory_space<vmem>>, vector<1x8x128xf32>,
    return
  }
  func.func @transform_0(%arg0: i32, %arg1: i32) -> (i32, i32, i32) {
    %c0_i32 = arith.constant 0 : i32
    %c0_i32_0 = arith.constant 0 : i32
    return %arg0, %c0_i32, %arg1 : i32, i32, i32
  }
  func.func @transform_1(%arg0: i32, %arg1: i32) -> (i32, i32, i32) {
    %c0_i32 = arith.constant 0 : i32
    %c0_i32_0 = arith.constant 0 : i32
    %c0_i32_1 = arith.constant 0 : i32
    return %arg0, %c0_i32, %c0_i32_0 : i32, i32, i32
  }
  func.func @transform_2(%arg0: i32, %arg1: i32) -> (i32, i32) {
    %c0_i32 = arith.constant 0 : i32
    %c0_i32_0 = arith.constant 0 : i32
    %c0_i32_1 = arith.constant 0 : i32
    return %c0_i32, %c0_i32_0 : i32, i32
  }
  func.func @transform_3(%arg0: i32, %arg1: i32) -> (i32, i32, i32) {
    %c0_i32 = arith.constant 0 : i32
    %c0_i32_0 = arith.constant 0 : i32
    %c0_i32_1 = arith.constant 0 : i32
    %c0_i32_2 = arith.constant 0 : i32
    return %c0_i32, %c0_i32_0, %c0_i32_1 : i32, i32, i32
  }
  func.func @transform_4(%arg0: i32, %arg1: i32) -> (i32, i32) {
    %c0_i32 = arith.constant 0 : i32
    %c0_i32_0 = arith.constant 0 : i32
    %c0_i32_1 = arith.constant 0 : i32
    return %c0_i32, %c0_i32_0 : i32, i32
  }
  func.func @transform_5(%arg0: i32, %arg1: i32) -> (i32, i32) {
    %c0_i32 = arith.constant 0 : i32
    %c0_i32_0 = arith.constant 0 : i32
    %c0_i32_1 = arith.constant 0 : i32
    return %c0_i32, %c0_i32_0 : i32, i32
  }
  func.func @transform_6(%arg0: i32, %arg1: i32) -> (i32, i32, i32) {
    %c0_i32 = arith.constant 0 : i32
    %c0_i32_0 = arith.constant 0 : i32
    return %arg0, %c0_i32, %arg1 : i32, i32, i32
  }
}

</mosaic_0001>

<llo_original>
// kernel: resnet_attn_forward.2
$region0: #{resnet_attn_forward.2}
  #allocation0 [shape = 'u32[]', space=smem, size = 0x4, offset = 0x4, fixed_abs, tag = 'smem constant byte address 0x4 - core index']
  #allocation1 [shape = 'u32[144,128]{1,0:T(1,128)}', space=vmem, size = 0x12000, scoped, tag = 'internal scratch']
  #allocation2 [shape = 'f32[16,1]{1,0:T(8,128)}', space=vmem, size = 0x2000, scoped, tag = 'scratch operand']
  #allocation3 [shape = 'f32[16,1]{1,0:T(8,128)}', space=vmem, size = 0x2000, scoped, tag = 'scratch operand']
  #allocation4 [shape = 'f32[16,16]{1,0:T(8,128)}', space=vmem, size = 0x2000, scoped, tag = 'scratch operand']
  %s0 = inlined_call_operand.vmem [shape: bf16[2,16,256], index: 0, kind: input, shape index: {}]
  %s1 = inlined_call_operand.vmem [shape: f32[64,16], index: 1, kind: input, shape index: {}]
  %s2 = inlined_call_operand.vmem [shape: f32[16,9], index: 2, kind: input, shape index: {}]
  %s3 = inlined_call_operand.vmem [shape: f32[2,16,16], index: 3, kind: output, shape index: {}]
  %s4 = sld [smem:[#allocation0]]
  $region94: #{resnet_attn_forward.2} parent=0
    _
  %s6 = ssub.s32 1, %s4
  %s7 = scalar_select 0, %s6, %s4
  $region1: #{resnet_attn_forward.2} parent=0
    #allocation5 [shape = 'u8[8192]{0}', space=vmem, size = 0x2000, scoped, tag = 'input window, operand 0']
    loop: start=0, step=1, limit=6
    $region2: #{resnet_attn_forward.2} parent=1 // loop_pre_header
      _
    $region3: #{resnet_attn_forward.2} parent=1 // loop_header
      %s9 = sphi 0, %s13
      %p10 = scmp.ge.s32.totalorder %s9, 6
      %s16 = sphi 0, %s28
      %s17 = sphi 0, %s24
      %s18 = sphi 0, %s16
      %s19 = sphi 0, %s17
      %s20 = sphi 0, %s18
      %s21 = sphi 0, %s19
      %s33 = sphi 0, %s35
      %s36 = sphi 0, %s33
      %s37 = sphi 0, %s36
      %s53 = sphi 0, %s37
      %s57 = sphi 0, %s57
      %s59 = sphi 0, %s57
      %s60 = sphi 0, %s59
      %s74 = sphi 0, %s60
      %s78 = sphi 0, %s78
      %s80 = sphi 0, %s78
      %s81 = sphi 0, %s80
      %s95 = sphi 0, %s81
      %s101 = sphi 0, %s103
      %s104 = sphi 0, %s101
      %s105 = sphi 0, %s104
      %s121 = sphi 0, %s105
    $region4: #{resnet_attn_forward.2} parent=1 // loop_header_branch
      %12 = sbr.rel (%p10) target = $region8
    $region5: #{resnet_attn_forward.2} parent=1 // loop_body
      %s14 = ssub.s32 %s9, 1
      %s15 = ssub.s32 %s9, 2
      %s22 = sadd.s32 1, %s17
      %p23 = scmp.ge.s32.totalorder %s22, 2
      %s24 = scalar_select %p23, 0, %s22
      %s25 = sadd.s32 1, %s16
      %s26 = scalar_select %p23, %s25, %s16
      %p27 = scmp.ge.s32.totalorder %s26, 2
      %s28 = scalar_select %p27, 0, %s26
      %s29 = ssub.s32 %s16, %s28
      %s30 = ssub.s32 %s17, %s24
      %s31 = sor.u32 %s29, %s30
      %p32 = scmp.eq.s32.totalorder %s31, 0
      %s34 = sadd.s32 %s33, 1
      %s35 = scalar_select %p32, %s33, %s34
      %p38 = pneg %p32
      %p39 = scmp.eq.s32.totalorder %s9, 3
      %p40 = por %p38, %p39
      %p41 = scmp.ne.s32.totalorder %s33, %s36
      %p42 = scmp.eq.s32.totalorder %s9, 0
      %p43 = por %p41, %p42
      %p44 = scmp.ne.s32.totalorder %s33, %s36
      %p45 = scmp.eq.s32.totalorder %s14, 3
      %p46 = por %p44, %p45
      %p47 = scmp.ne.s32.totalorder %s36, %s37
      %p48 = scmp.eq.s32.totalorder %s14, 0
      %p49 = por %p47, %p48
      %p50 = scmp.ne.s32.totalorder %s36, %s37
      %p51 = scmp.eq.s32.totalorder %s15, 3
      %p52 = por %p50, %p51
      %p54 = scmp.ne.s32.totalorder %s37, %s53
      %p55 = scmp.eq.s32.totalorder %s15, 0
      %p56 = por %p54, %p55
      %s58 = sadd.s32 %s57, 1
      %p61 = scmp.eq.s32.totalorder %s9, 3
      %p62 = scmp.ne.s32.totalorder %s57, %s59
      %p63 = scmp.eq.s32.totalorder %s9, 0
      %p64 = por %p62, %p63
      %p65 = scmp.ne.s32.totalorder %s57, %s59
      %p66 = scmp.eq.s32.totalorder %s14, 3
      %p67 = por %p65, %p66
      %p68 = scmp.ne.s32.totalorder %s59, %s60
      %p69 = scmp.eq.s32.totalorder %s14, 0
      %p70 = por %p68, %p69
      %p71 = scmp.ne.s32.totalorder %s59, %s60
      %p72 = scmp.eq.s32.totalorder %s15, 3
      %p73 = por %p71, %p72
      %p75 = scmp.ne.s32.totalorder %s60, %s74
      %p76 = scmp.eq.s32.totalorder %s15, 0
      %p77 = por %p75, %p76
      %s79 = sadd.s32 %s78, 1
      %p82 = scmp.eq.s32.totalorder %s9, 3
      %p83 = scmp.ne.s32.totalorder %s78, %s80
      %p84 = scmp.eq.s32.totalorder %s9, 0
      %p85 = por %p83, %p84
      %p86 = scmp.ne.s32.totalorder %s78, %s80
      %p87 = scmp.eq.s32.totalorder %s14, 3
      %p88 = por %p86, %p87
      %p89 = scmp.ne.s32.totalorder %s80, %s81
      %p90 = scmp.eq.s32.totalorder %s14, 0
      %p91 = por %p89, %p90
      %p92 = scmp.ne.s32.totalorder %s80, %s81
      %p93 = scmp.eq.s32.totalorder %s15, 3
      %p94 = por %p92, %p93
      %p96 = scmp.ne.s32.totalorder %s81, %s95
      %p97 = scmp.eq.s32.totalorder %s15, 0
      %p98 = por %p96, %p97
      %s99 = ssub.s32 %s16, %s28
      %p100 = scmp.eq.s32.totalorder %s99, 0
      %s102 = sadd.s32 %s101, 1
      %s103 = scalar_select %p100, %s101, %s102
      %p106 = pneg %p100
      %p107 = scmp.eq.s32.totalorder %s9, 3
      %p108 = por %p106, %p107
      %p109 = scmp.ne.s32.totalorder %s101, %s104
      %p110 = scmp.eq.s32.totalorder %s9, 0
      %p111 = por %p109, %p110
      %p112 = scmp.ne.s32.totalorder %s101, %s104
      %p113 = scmp.eq.s32.totalorder %s14, 3
      %p114 = por %p112, %p113
      %p115 = scmp.ne.s32.totalorder %s104, %s105
      %p116 = scmp.eq.s32.totalorder %s14, 0
      %p117 = por %p115, %p116
      %p118 = scmp.ne.s32.totalorder %s104, %s105
      %p119 = scmp.eq.s32.totalorder %s15, 3
      %p120 = por %p118, %p119
      %p122 = scmp.ne.s32.totalorder %s105, %s121
      %p123 = scmp.eq.s32.totalorder %s15, 0
      %p124 = por %p122, %p123
      %p125 = scmp.le.s32.totalorder 1, %s9
      %p126 = scmp.lt.s32.totalorder %s9, 5
      %p127 = pnand %p125, %p126
      %p128 = pneg %p127
      // Predicated region
      $region9: #{resnet_attn_forward.2} parent=5 // pred_check
        _
      $region10: #{resnet_attn_forward.2} parent=5 // pred_check_branch
        %130 = sbr.rel (%p127) target = $region12
      $region11: #{resnet_attn_forward.2} parent=5 // pred_region
        %s131 = ssub.s32 %s9, 1
        // Predicated region
        $region13: #{resnet_attn_forward.2} parent=11 // pred_check
          %p132 = pneg %p70
        $region14: #{resnet_attn_forward.2} parent=11 // pred_check_branch
          %134 = sbr.rel (%p132) target = $region16
        $region15: #{resnet_attn_forward.2} parent=11 // pred_region
          _
        $region16: #{resnet_attn_forward.2} parent=11 // pred_fallthru
          _
        // Predicated region
        $region17: #{resnet_attn_forward.2} parent=11 // pred_check
          %p135 = pneg %p91
        $region18: #{resnet_attn_forward.2} parent=11 // pred_check_branch
          %137 = sbr.rel (%p135) target = $region20
        $region19: #{resnet_attn_forward.2} parent=11 // pred_region
          _
        $region20: #{resnet_attn_forward.2} parent=11 // pred_fallthru
          _
      $region12: #{resnet_attn_forward.2} parent=5 // pred_fallthru
        _
      %p138 = scmp.lt.s32.totalorder %s9, 4
      // Predicated region
      $region21: #{resnet_attn_forward.2} parent=5 // pred_check
        %p139 = pneg %p138
      $region22: #{resnet_attn_forward.2} parent=5 // pred_check_branch
        %141 = sbr.rel (%p139) target = $region24
      $region23: #{resnet_attn_forward.2} parent=5 // pred_region
        // Predicated region
        $region25: #{resnet_attn_forward.2} parent=23 // pred_check
          %p142 = pneg %p43
        $region26: #{resnet_attn_forward.2} parent=23 // pred_check_branch
          %144 = sbr.rel (%p142) target = $region28
        $region27: #{resnet_attn_forward.2} parent=23 // pred_region
          %s145 = sand.u32 %s33, 1
          %s146 = sand.u32 %s33, 1
          %s147 = smul.addr %s146, 8
          %s148 = scalar_lea.vmem [#allocation5], %s147
          %s149 = smul.addr %s16, 4
          %s150 = sadd.s32 %s17, %s149
          %s151 = smul.addr %s150, 4
          %s152 = scalar_lea.vmem %s0, %s151
          // Predicated region
          $region29: #{resnet_attn_forward.2} parent=27 // pred_check
            _
          $region30: #{resnet_attn_forward.2} parent=27 // pred_check_branch
            %154 = sbr.rel (0) target = $region32
          $region31: #{resnet_attn_forward.2} parent=27 // pred_region
            // Predicated region
            $region33: #{resnet_attn_forward.2} parent=31 // pred_check
              _
            $region34: #{resnet_attn_forward.2} parent=31 // pred_check_branch
              %156 = sbr.rel target = $region36
            $region35: #{resnet_attn_forward.2} parent=31 // pred_region
              // Predicated region
              $region48: #{resnet_attn_forward.2} parent=35 // pred_check
                _
              $region49: #{resnet_attn_forward.2} parent=35 // pred_check_branch
                %173 = sbr.rel (0) target = $region51
              $region50: #{resnet_attn_forward.2} parent=35 // pred_region
                loop: start=0, step=1, limit=1
                $region52: #{resnet_attn_forward.2} parent=50 // loop_pre_header
                  _
                $region53: #{resnet_attn_forward.2} parent=50 // loop_header
                  %s175 = sphi 0, %s179
                  %p176 = scmp.ge.s32.totalorder %s175, 1
                  %s180 = sphi %s152, %s152
                  %s181 = sphi %s148, %s148
                $region54: #{resnet_attn_forward.2} parent=50 // loop_header_branch
                  %178 = sbr.rel (%p176) target = $region58
                $region55: #{resnet_attn_forward.2} parent=50 // loop_body
                  _
                $region56: #{resnet_attn_forward.2} parent=50 // loop_footer
                  %s179 = sadd.s32 1, %s175
                $region57: #{resnet_attn_forward.2} parent=50 // loop_footer_branch
                  %174 = sbr.rel target = $region53
                $region58: #{resnet_attn_forward.2} parent=50 // loop_exit
                  _
                loop: start=0, step=1, limit=1
                $region59: #{resnet_attn_forward.2} parent=50 // loop_pre_header
                  _
                $region60: #{resnet_attn_forward.2} parent=50 // loop_header
                  %s184 = sphi 0, %s188
                  %p185 = scmp.ge.s32.totalorder %s184, 1
                  %s189 = sphi %s152, %s152
                  %s190 = sphi %s148, %s148
                $region61: #{resnet_attn_forward.2} parent=50 // loop_header_branch
                  %187 = sbr.rel (%p185) target = $region65
                $region62: #{resnet_attn_forward.2} parent=50 // loop_body
                  %v191 = vld [vmem:[%s189] sm:$0xf]
                  %192 = vst [vmem:[%s190] sm:$0xf] %v191
                  %v193 = vld [vmem:[%s189 + $0x8] sm:$0xf]
                  %194 = vst [vmem:[%s190 + $0x4] sm:$0xf] %v193
                $region63: #{resnet_attn_forward.2} parent=50 // loop_footer
                  %s188 = sadd.s32 1, %s184
                $region64: #{resnet_attn_forward.2} parent=50 // loop_footer_branch
                  %183 = sbr.rel target = $region60
                $region65: #{resnet_attn_forward.2} parent=50 // loop_exit
                  _
              $region51: #{resnet_attn_forward.2} parent=35 // pred_fallthru
                _
            $region36: #{resnet_attn_forward.2} parent=31 // pred_fallthru
              _
            // Predicated region
            $region37: #{resnet_attn_forward.2} parent=31 // pred_check
              _
            $region38: #{resnet_attn_forward.2} parent=31 // pred_check_branch
              %158 = sbr.rel (0) target = $region40
            $region39: #{resnet_attn_forward.2} parent=31 // pred_region
              loop: start=0, step=1, limit=1
              $region41: #{resnet_attn_forward.2} parent=39 // loop_pre_header
                _
              $region42: #{resnet_attn_forward.2} parent=39 // loop_header
                %s161 = sphi 0, %s165
                %p162 = scmp.ge.s32.totalorder %s161, 1
                %s166 = sphi %s152, %s152
                %s167 = sphi %s148, %s148
              $region43: #{resnet_attn_forward.2} parent=39 // loop_header_branch
                %164 = sbr.rel (%p162) target = $region47
              $region44: #{resnet_attn_forward.2} parent=39 // loop_body
                %v168 = vld [vmem:[%s166] sm:$0xf]
                %169 = vst [vmem:[%s167] sm:$0xf] %v168
                %v170 = vld [vmem:[%s166 + $0x8] sm:$0xf]
                %171 = vst [vmem:[%s167 + $0x4] sm:$0xf] %v170
              $region45: #{resnet_attn_forward.2} parent=39 // loop_footer
                %s165 = sadd.s32 1, %s161
              $region46: #{resnet_attn_forward.2} parent=39 // loop_footer_branch
                %160 = sbr.rel target = $region42
              $region47: #{resnet_attn_forward.2} parent=39 // loop_exit
                _
            $region40: #{resnet_attn_forward.2} parent=31 // pred_fallthru
              _
          $region32: #{resnet_attn_forward.2} parent=27 // pred_fallthru
            _
          %195 = vnop
        $region28: #{resnet_attn_forward.2} parent=23 // pred_fallthru
          _
      $region24: #{resnet_attn_forward.2} parent=5 // pred_fallthru
        _
      %p196 = scmp.le.s32.totalorder 1, %s9
      %p197 = scmp.lt.s32.totalorder %s9, 5
      %p198 = pnand %p196, %p197
      %p199 = pneg %p198
      // Predicated region
      $region66: #{resnet_attn_forward.2} parent=5 // pred_check
        _
      $region67: #{resnet_attn_forward.2} parent=5 // pred_check_branch
        %201 = sbr.rel (%p198) target = $region69
      $region68: #{resnet_attn_forward.2} parent=5 // pred_region
        %s202 = ssub.s32 %s9, 1
        %s203 = sand.u32 %s36, 1
        %s204 = sand.u32 %s36, 1
        %s205 = smul.addr %s204, 8
        %s206 = scalar_lea.vmem [#allocation5], %s205
        // Predicated region
        $region70: #{resnet_attn_forward.2} parent=68 // pred_check
          %p207 = pneg %p49
        $region71: #{resnet_attn_forward.2} parent=68 // pred_check_branch
          %209 = sbr.rel (%p207) target = $region73
        $region72: #{resnet_attn_forward.2} parent=68 // pred_region
          _
        $region73: #{resnet_attn_forward.2} parent=68 // pred_fallthru
          _
        %s210 = sand.u32 %s36, 1
        %s211 = sand.u32 %s36, 1
        %s212 = smul.addr %s211, 8
        %s213 = scalar_lea.vmem [#allocation5], %s212
        %p214 = pneg %p49
        %p215 = pneg %p46
        %p216 = pneg %p70
        %p217 = pneg %p67
        %p218 = pneg %p91
        %p219 = pneg %p88
        %p220 = pneg %p117
        %p221 = pneg %p114
        %p222 = scmp.lt.s32.totalorder %s18, 1
        %s223 = scalar_select %p222, %s18, 1
        %s224 = smul.addr %s223, 2
        %s225 = smul.addr %s224, 8
        %s226 = scalar_lea.vmem %s3, %s225
        %p227 = scmp.lt.s32.totalorder %s18, 1
        %s228 = scalar_select %p227, %s18, 1
        %s229 = smul.addr %s228, 2
        %s230 = smul.addr %s229, 8
        %s231 = scalar_lea.vmem %s3, %s230
        %p232 = scmp.eq.s32.totalorder %s19, 0
        // Predicated region
        $region74: #{resnet_attn_forward.2} parent=68 // pred_check
          %p233 = pneg %p232
        $region75: #{resnet_attn_forward.2} parent=68 // pred_check_branch
          %235 = sbr.rel (%p233) target = $region77
        $region76: #{resnet_attn_forward.2} parent=68 // pred_region
          %vm236 = vcmask 7168
          %237 = vst.msk [vmem:[#allocation2] sm:$0xff] %vm236, -inf
          %238 = vst.msk [vmem:[#allocation2 + $0x8] sm:$0xff] %vm236, -inf
          %239 = vst.msk [vmem:[#allocation3] sm:$0xff] %vm236, 0.0
          %240 = vst.msk [vmem:[#allocation3 + $0x8] sm:$0xff] %vm236, 0.0
          %vm241 = vcmask 130048
          %242 = vst.msk [vmem:[#allocation4] sm:$0xff] %vm241, 0.0
          %243 = vst.msk [vmem:[#allocation4 + $0x8] sm:$0xff] %vm241, 0.0
        $region77: #{resnet_attn_forward.2} parent=68 // pred_fallthru
          _
        %v244 = vld [vmem:[%s206] sm:$0xf]
        %v245 = vld [vmem:[%s206 + $0x4] sm:$0xf]
        %v246 = vunpack.c.l.bf16 %v244
        %v247 = vunpack.c.l.bf16 %v245
        %v248 = vld [vmem:[%s2] sm:$0xff]
        %v249 = vld [vmem:[%s2 + $0x8] sm:$0xff]
        %v250 = vld [vmem:[%s1 + $0x10] sm:$0xff]
        %v251 = vld [vmem:[%s1 + $0x18] sm:$0xff]
        %v252 = vld [vmem:[%s1 + $0x20] sm:$0xff]
        %v253 = vld [vmem:[%s1 + $0x28] sm:$0xff]
        %vm254 = vcmask 130048
        %v256 = vsel %vm254, %v250, 0
        %v259 = vsel %vm254, %v251, 0
        %v262 = vsel %vm254, %v252, 0
        %v265 = vsel %vm254, %v253, 0
        %267 = vmatprep.subr.mxu0 0.0
        %268 = vmatpush1.msra.mxu0 %v246
        %269 = vmatprep.subr.mxu0 0.0
        %270 = vmatpush1.msra.mxu0 %v247
        %271 = vmatprep.subr.mxu0 0.0
        %272 = vmatpush1.msra.mxu0 0.0
        %273 = vmatprep.subr.mxu0 0.0
        %274 = vmatpush1.msra.mxu0 0.0
        %275 = vmatprep.subr.mxu0 0.0
        %276 = vmatpush1.msra.mxu0 0.0
        %277 = vmatprep.subr.mxu0 0.0
        %278 = vmatpush1.msra.mxu0 0.0
        %279 = vmatprep.subr.mxu0 0.0
        %280 = vmatpush1.msra.mxu0 0.0
        %281 = vmatprep.subr.mxu0 0.0
        %282 = vmatpush1.msra.mxu0 0.0
        %283 = vmatprep.subr.mxu0 0.0
        %284 = vmatpush1.msra.mxu0 0.0
        %285 = vmatprep.subr.mxu0 0.0
        %286 = vmatpush1.msra.mxu0 0.0
        %287 = vmatprep.subr.mxu0 0.0
        %288 = vmatpush1.msra.mxu0 0.0
        %289 = vmatprep.subr.mxu0 0.0
        %290 = vmatpush1.msra.mxu0 0.0
        %291 = vmatprep.subr.mxu0 0.0
        %292 = vmatpush1.msra.mxu0 0.0
        %293 = vmatprep.subr.mxu0 0.0
        %294 = vmatpush1.msra.mxu0 0.0
        %295 = vmatprep.subr.mxu0 0.0
        %296 = vmatpush1.msra.mxu0 0.0
        %297 = vmatprep.subr.mxu0 0.0
        %298 = vmatpush1.msra.mxu0 0.0
        %299 = vmatprep.subr.mxu0 0.0
        %300 = vmatpush1.msra.mxu0 0.0
        %301 = vmatprep.subr.mxu0 0.0
        %302 = vmatpush1.msra.mxu0 0.0
        %303 = vmatprep.subr.mxu0 0.0
        %304 = vmatpush1.msra.mxu0 0.0
        %305 = vmatprep.subr.mxu0 0.0
        %306 = vmatpush1.msra.mxu0 0.0
        %307 = vmatprep.subr.mxu0 0.0
        %308 = vmatpush1.msra.mxu0 0.0
        %309 = vmatprep.subr.mxu0 0.0
        %310 = vmatpush1.msra.mxu0 0.0
        %311 = vmatprep.subr.mxu0 0.0
        %312 = vmatpush1.msra.mxu0 0.0
        %313 = vmatprep.subr.mxu0 0.0
        %314 = vmatpush1.msra.mxu0 0.0
        %315 = vmatprep.subr.mxu0 0.0
        %316 = vmatpush1.msra.mxu0 0.0
        %317 = vmatprep.subr.mxu0 0.0
        %318 = vmatpush1.msra.mxu0 0.0
        %319 = vmatprep.subr.mxu0 0.0
        %320 = vmatpush1.msra.mxu0 0.0
        %321 = vmatprep.subr.mxu0 0.0
        %322 = vmatpush1.msra.mxu0 0.0
        %323 = vmatprep.subr.mxu0 0.0
        %324 = vmatpush1.msra.mxu0 0.0
        %325 = vmatprep.subr.mxu0 0.0
        %326 = vmatpush1.msra.mxu0 0.0
        %327 = vmatprep.subr.mxu0 0.0
        %328 = vmatpush1.msra.mxu0 0.0
        %329 = vmatprep.subr.mxu0 0.0
        %330 = vmatpush1.msra.mxu0 0.0
        %331 = vmatprep.mubr.f32.mxu0 0.0
        %332 = vmatmul.mubr.f32.gmra.mrb[0].mxu0 %v256
        %v333 = vpop.f32.mrb[0].mxu0
        %v334 = vadd.f32 0.0, %v333
        %v335 = vpop.f32.mrb[0].mxu0
        %336 = vmatprep.mubr.f32.mxu0 0.0
        %337 = vmatmul.mubr.f32.gmra.mrb[0].mxu0 %v259
        %v338 = vpop.f32.mrb[0].mxu0
        %v339 = vadd.f32 0.0, %v338
        %v340 = vpop.f32.mrb[0].mxu0
        %341 = vmatprep.mubr.f32.mxu0 0.0
        %342 = vmatmul.mubr.f32.gmra.mrb[0].mxu0 %v262
        %v343 = vpop.f32.mrb[0].mxu0
        %v344 = vadd.f32 0.0, %v343
        %v345 = vpop.f32.mrb[0].mxu0
        %346 = vmatprep.mubr.f32.mxu0 0.0
        %347 = vmatmul.mubr.f32.gmra.mrb[0].mxu0 %v265
        %v348 = vpop.f32.mrb[0].mxu0
        %v349 = vadd.f32 0.0, %v348
        %v350 = vpop.f32.mrb[0].mxu0
        %351 = vdwg.mxu0
        %353 = vset.pattern.permute.xlu0 1
        %354 = vperm.xlu0 %353, %v248
        %v355 = vpop.permute.xlu0 %354
        %358 = vset.pattern.permute.xlu0 1
        %359 = vperm.xlu0 %358, %v249
        %v360 = vpop.permute.xlu0 %359
        %v362 = vadd.f32 %v334, %v355
        %v363 = vadd.f32 %v339, %v360
        %364 = vset.pattern.permute.xlu0 2
        %365 = vperm.xlu0 %364, %v248
        %v366 = vpop.permute.xlu0 %365
        %368 = vset.pattern.permute.xlu0 2
        %369 = vperm.xlu0 %368, %v249
        %v370 = vpop.permute.xlu0 %369
        %v372 = vadd.f32 %v344, %v366
        %v373 = vadd.f32 %v349, %v370
        %374 = vmax.xlane.f32.xlu0 %v362
        %v375 = vpop.xlane.xlu0 %374
        %376 = vmax.xlane.f32.xlu0 %v363
        %v377 = vpop.xlane.xlu0 %376
        %v378 = vld [vmem:[#allocation2] sm:$0xff]
        %v379 = vld [vmem:[#allocation2 + $0x8] sm:$0xff]
        %v380 = vmax.f32 %v378, %v375
        %v381 = vmax.f32 %v379, %v377
        %v382 = vsub.f32 %v378, %v380
        %v383 = vsub.f32 %v379, %v381
        %v384 = vmul.f32 %v382, 1.442695
        %v385 = vpow.pop %v384
        %v386 = vmul.f32 %v383, 1.442695
        %v387 = vpow.pop %v386
        %389 = vset.pattern.permute.xlu0 0
        %390 = vperm.xlu0 %389, %v380
        %v391 = vpop.permute.xlu0 %390
        %394 = vset.pattern.permute.xlu0 0
        %395 = vperm.xlu0 %394, %v381
        %v396 = vpop.permute.xlu0 %395
        %v398 = vsub.f32 %v362, %v391
        %v399 = vsub.f32 %v363, %v396
        %v400 = vmul.f32 %v398, 1.442695
        %v401 = vpow.pop %v400
        %v402 = vmul.f32 %v399, 1.442695
        %v403 = vpow.pop %v402
        %s404 = smul.u32 %s19, 128
        %v405 = vlaneseq
        %v406 = vand.u32 %v405, 127
        %v407 = vstv %s404
        %v408 = vadd.s32 %v407, %v406
        %vm409 = vcmp.lt.s32.totalorder %v408, 196
        %v410 = vsel %vm409, 1, 0
        %vm411 = vcmp.eq.s32.totalorder %v410, 1
        %v412 = vsel %vm411, %v401, 0.0
        %v413 = vsel %vm411, %v403, 0.0
        %v414 = vld [vmem:[#allocation3] sm:$0xff]
        %v415 = vld [vmem:[#allocation3 + $0x8] sm:$0xff]
        %v416 = vmul.f32 %v385, %v414
        %v417 = vmul.f32 %v387, %v415
        %418 = vadd.xlane.f32.xlu0 %v412
        %v419 = vpop.xlane.xlu0 %418
        %420 = vadd.xlane.f32.xlu0 %v413
        %v421 = vpop.xlane.xlu0 %420
        %v422 = vadd.f32 %v416, %v419
        %v423 = vadd.f32 %v417, %v421
        %vm424 = vcmask 7168
        %425 = vst.msk [vmem:[#allocation3] sm:$0xff] %vm424, %v422
        %426 = vst.msk [vmem:[#allocation3 + $0x8] sm:$0xff] %vm424, %v423
        %427 = vmatprep.subr.mxu0 0.0
        %428 = vmatpush1.xpose.msra.mxu0 %v372
        %429 = vmatprep.subr.mxu0 0.0
        %430 = vmatpush1.xpose.msra.mxu0 %v373
        %431 = vmatprep.subr.mxu0 0.0
        %432 = vmatpush1.xpose.msra.mxu0 0.0
        %433 = vmatprep.subr.mxu0 0.0
        %434 = vmatpush1.xpose.msra.mxu0 0.0
        %435 = vmatprep.subr.mxu0 0.0
        %436 = vmatpush1.xpose.msra.mxu0 0.0
        %437 = vmatprep.subr.mxu0 0.0
        %438 = vmatpush1.xpose.msra.mxu0 0.0
        %439 = vmatprep.subr.mxu0 0.0
        %440 = vmatpush1.xpose.msra.mxu0 0.0
        %441 = vmatprep.subr.mxu0 0.0
        %442 = vmatpush1.xpose.msra.mxu0 0.0
        %443 = vmatprep.subr.mxu0 0.0
        %444 = vmatpush1.xpose.msra.mxu0 0.0
        %445 = vmatprep.subr.mxu0 0.0
        %446 = vmatpush1.xpose.msra.mxu0 0.0
        %447 = vmatprep.subr.mxu0 0.0
        %448 = vmatpush1.xpose.msra.mxu0 0.0
        %449 = vmatprep.subr.mxu0 0.0
        %450 = vmatpush1.xpose.msra.mxu0 0.0
        %451 = vmatprep.subr.mxu0 0.0
        %452 = vmatpush1.xpose.msra.mxu0 0.0
        %453 = vmatprep.subr.mxu0 0.0
        %454 = vmatpush1.xpose.msra.mxu0 0.0
        %455 = vmatprep.subr.mxu0 0.0
        %456 = vmatpush1.xpose.msra.mxu0 0.0
        %457 = vmatprep.subr.mxu0 0.0
        %458 = vmatpush1.xpose.msra.mxu0 0.0
        %459 = vmatprep.subr.mxu0 0.0
        %460 = vmatpush1.xpose.msra.mxu0 0.0
        %461 = vmatprep.subr.mxu0 0.0
        %462 = vmatpush1.xpose.msra.mxu0 0.0
        %463 = vmatprep.subr.mxu0 0.0
        %464 = vmatpush1.xpose.msra.mxu0 0.0
        %465 = vmatprep.subr.mxu0 0.0
        %466 = vmatpush1.xpose.msra.mxu0 0.0
        %467 = vmatprep.subr.mxu0 0.0
        %468 = vmatpush1.xpose.msra.mxu0 0.0
        %469 = vmatprep.subr.mxu0 0.0
        %470 = vmatpush1.xpose.msra.mxu0 0.0
        %471 = vmatprep.subr.mxu0 0.0
        %472 = vmatpush1.xpose.msra.mxu0 0.0
        %473 = vmatprep.subr.mxu0 0.0
        %474 = vmatpush1.xpose.msra.mxu0 0.0
        %475 = vmatprep.subr.mxu0 0.0
        %476 = vmatpush1.xpose.msra.mxu0 0.0
        %477 = vmatprep.subr.mxu0 0.0
        %478 = vmatpush1.xpose.msra.mxu0 0.0
        %479 = vmatprep.subr.mxu0 0.0
        %480 = vmatpush1.xpose.msra.mxu0 0.0
        %481 = vmatprep.subr.mxu0 0.0
        %482 = vmatpush1.xpose.msra.mxu0 0.0
        %483 = vmatprep.subr.mxu0 0.0
        %484 = vmatpush1.xpose.msra.mxu0 0.0
        %485 = vmatprep.subr.mxu0 0.0
        %486 = vmatpush1.xpose.msra.mxu0 0.0
        %487 = vmatprep.subr.mxu0 0.0
        %488 = vmatpush1.xpose.msra.mxu0 0.0
        %489 = vmatprep.subr.mxu0 0.0
        %490 = vmatpush1.xpose.msra.mxu0 0.0
        %491 = vmatprep.mubr.f32.mxu0 0.0
        %492 = vmatmul.mubr.f32.gmra.mrb[0].mxu0 %v412
        %v493 = vpop.f32.mrb[0].mxu0
        %v494 = vadd.f32 0.0, %v493
        %v495 = vpop.f32.mrb[0].mxu0
        %496 = vmatprep.mubr.f32.mxu0 0.0
        %497 = vmatmul.mubr.f32.gmra.mrb[0].mxu0 %v413
        %v498 = vpop.f32.mrb[0].mxu0
        %v499 = vadd.f32 0.0, %v498
        %v500 = vpop.f32.mrb[0].mxu0
        %501 = vdwg.mxu0
        %v502 = vld [vmem:[#allocation4] sm:$0xff]
        %v503 = vld [vmem:[#allocation4 + $0x8] sm:$0xff]
        %505 = vset.pattern.permute.xlu0 0
        %506 = vperm.xlu0 %505, %v385
        %v507 = vpop.permute.xlu0 %506
        %510 = vset.pattern.permute.xlu0 0
        %511 = vperm.xlu0 %510, %v387
        %v512 = vpop.permute.xlu0 %511
        %v514 = vmul.f32 %v507, %v502
        %v515 = vmul.f32 %v512, %v503
        %v516 = vadd.f32 %v514, %v494
        %v517 = vadd.f32 %v515, %v499
        %518 = vst.msk [vmem:[#allocation4] sm:$0xff] %vm254, %v516
        %519 = vst.msk [vmem:[#allocation4 + $0x8] sm:$0xff] %vm254, %v517
        %520 = vst.msk [vmem:[#allocation2] sm:$0xff] %vm424, %v380
        %521 = vst.msk [vmem:[#allocation2 + $0x8] sm:$0xff] %vm424, %v381
        %p522 = scmp.eq.s32.totalorder %s19, 1
        // Predicated region
        $region78: #{resnet_attn_forward.2} parent=68 // pred_check
          %p523 = pneg %p522
        $region79: #{resnet_attn_forward.2} parent=68 // pred_check_branch
          %525 = sbr.rel (%p523) target = $region81
        $region80: #{resnet_attn_forward.2} parent=68 // pred_region
          %v526 = vld [vmem:[#allocation4] sm:$0xff]
          %v527 = vld [vmem:[#allocation4 + $0x8] sm:$0xff]
          %v528 = vld [vmem:[#allocation3] sm:$0xff]
          %v529 = vld [vmem:[#allocation3 + $0x8] sm:$0xff]
          %531 = vset.pattern.permute.xlu0 0
          %532 = vperm.xlu0 %531, %v528
          %v533 = vpop.permute.xlu0 %532
          %536 = vset.pattern.permute.xlu0 0
          %537 = vperm.xlu0 %536, %v529
          %v538 = vpop.permute.xlu0 %537
          %v540 = vrcp.pop %v533
          %v541 = vmul.f32 %v526, %v540
          %v542 = vrcp.pop %v538
          %v543 = vmul.f32 %v527, %v542
          %544 = vst.msk [vmem:[%s231] sm:$0xff] %vm254, %v541
          %545 = vst.msk [vmem:[%s231 + $0x8] sm:$0xff] %vm254, %v543
        $region81: #{resnet_attn_forward.2} parent=68 // pred_fallthru
          _
        %p546 = scmp.lt.s32.totalorder %s18, 1
        %s547 = scalar_select %p546, %s18, 1
        %s548 = smul.addr %s547, 2
        %s549 = smul.addr %s548, 8
        %s550 = scalar_lea.vmem %s3, %s549
        // Predicated region
        $region82: #{resnet_attn_forward.2} parent=68 // pred_check
          %p551 = pneg %p114
        $region83: #{resnet_attn_forward.2} parent=68 // pred_check_branch
          %553 = sbr.rel (%p551) target = $region85
        $region84: #{resnet_attn_forward.2} parent=68 // pred_region
          _
        $region85: #{resnet_attn_forward.2} parent=68 // pred_fallthru
          _
      $region69: #{resnet_attn_forward.2} parent=5 // pred_fallthru
        _
      %p554 = scmp.le.s32.totalorder 2, %s9
      // Predicated region
      $region86: #{resnet_attn_forward.2} parent=5 // pred_check
        %p555 = pneg %p554
      $region87: #{resnet_attn_forward.2} parent=5 // pred_check_branch
        %557 = sbr.rel (%p555) target = $region89
      $region88: #{resnet_attn_forward.2} parent=5 // pred_region
        %s558 = ssub.s32 %s9, 2
        // Predicated region
        $region90: #{resnet_attn_forward.2} parent=88 // pred_check
          %p559 = pneg %p120
        $region91: #{resnet_attn_forward.2} parent=88 // pred_check_branch
          %561 = sbr.rel (%p559) target = $region93
        $region92: #{resnet_attn_forward.2} parent=88 // pred_region
          %p562 = scmp.lt.s32.totalorder %s20, 1
          %s563 = scalar_select %p562, %s20, 1
          %s564 = smul.addr %s563, 2
          %s565 = smul.addr %s564, 8
          %s566 = scalar_lea.vmem %s3, %s565
        $region93: #{resnet_attn_forward.2} parent=88 // pred_fallthru
          _
      $region89: #{resnet_attn_forward.2} parent=5 // pred_fallthru
        _
    $region6: #{resnet_attn_forward.2} parent=1 // loop_footer
      %s13 = sadd.s32 1, %s9
    $region7: #{resnet_attn_forward.2} parent=1 // loop_footer_branch
      %8 = sbr.rel target = $region3
    $region8: #{resnet_attn_forward.2} parent=1 // loop_exit
      _

// kernel: resnet_attn_forward.3
$region0: #{resnet_attn_forward.3}
  #allocation0 [shape = 'u32[]', space=smem, size = 0x4, offset = 0x4, fixed_abs, tag = 'smem constant byte address 0x4 - core index']
  #allocation1 [shape = 'u32[144,128]{1,0:T(1,128)}', space=vmem, size = 0x12000, scoped, tag = 'internal scratch']
  %s0 = inlined_call_operand.vmem [shape: bf16[2,16,256], index: 0, kind: input, shape index: {}]
  %s1 = inlined_call_operand.vmem [shape: f32[2,16,16], index: 1, kind: input, shape index: {}]
  %s2 = inlined_call_operand.vmem [shape: f32[64,16], index: 2, kind: input, shape index: {}]
  %s3 = inlined_call_operand.vmem [shape: f32[3,8,8], index: 3, kind: input, shape index: {}]
  %s4 = inlined_call_operand.vmem [shape: f32[16,16], index: 4, kind: input, shape index: {}]
  %s5 = inlined_call_operand.vmem [shape: f32[16,9], index: 5, kind: input, shape index: {}]
  %s6 = inlined_call_operand.vmem [shape: f32[2,8,256], index: 6, kind: output, shape index: {}]
  %s7 = sld [smem:[#allocation0]]
  $region98: #{resnet_attn_forward.3} parent=0
    _
  %s9 = ssub.s32 1, %s7
  %s10 = scalar_select 0, %s9, %s7
  $region1: #{resnet_attn_forward.3} parent=0
    #allocation2 [shape = 'u8[8192]{0}', space=vmem, size = 0x2000, scoped, tag = 'input window, operand 0']
    loop: start=0, step=1, limit=6
    $region2: #{resnet_attn_forward.3} parent=1 // loop_pre_header
      _
    $region3: #{resnet_attn_forward.3} parent=1 // loop_header
      %s12 = sphi 0, %s16
      %p13 = scmp.ge.s32.totalorder %s12, 6
      %s19 = sphi 0, %s31
      %s20 = sphi 0, %s27
      %s21 = sphi 0, %s19
      %s22 = sphi 0, %s20
      %s23 = sphi 0, %s21
      %s24 = sphi 0, %s22
      %s36 = sphi 0, %s38
      %s39 = sphi 0, %s36
      %s40 = sphi 0, %s39
      %s56 = sphi 0, %s40
      %s62 = sphi 0, %s64
      %s65 = sphi 0, %s62
      %s66 = sphi 0, %s65
      %s82 = sphi 0, %s66
      %s86 = sphi 0, %s86
      %s88 = sphi 0, %s86
      %s89 = sphi 0, %s88
      %s103 = sphi 0, %s89
      %s107 = sphi 0, %s107
      %s109 = sphi 0, %s107
      %s110 = sphi 0, %s109
      %s124 = sphi 0, %s110
      %s128 = sphi 0, %s128
      %s130 = sphi 0, %s128
      %s131 = sphi 0, %s130
      %s145 = sphi 0, %s131
      %s149 = sphi 0, %s149
      %s151 = sphi 0, %s149
      %s152 = sphi 0, %s151
      %s166 = sphi 0, %s152
      %s174 = sphi 0, %s176
      %s177 = sphi 0, %s174
      %s178 = sphi 0, %s177
      %s194 = sphi 0, %s178
    $region4: #{resnet_attn_forward.3} parent=1 // loop_header_branch
      %15 = sbr.rel (%p13) target = $region8
    $region5: #{resnet_attn_forward.3} parent=1 // loop_body
      %s17 = ssub.s32 %s12, 1
      %s18 = ssub.s32 %s12, 2
      %s25 = sadd.s32 1, %s20
      %p26 = scmp.ge.s32.totalorder %s25, 2
      %s27 = scalar_select %p26, 0, %s25
      %s28 = sadd.s32 1, %s19
      %s29 = scalar_select %p26, %s28, %s19
      %p30 = scmp.ge.s32.totalorder %s29, 2
      %s31 = scalar_select %p30, 0, %s29
      %s32 = ssub.s32 %s19, %s31
      %s33 = ssub.s32 %s20, %s27
      %s34 = sor.u32 %s32, %s33
      %p35 = scmp.eq.s32.totalorder %s34, 0
      %s37 = sadd.s32 %s36, 1
      %s38 = scalar_select %p35, %s36, %s37
      %p41 = pneg %p35
      %p42 = scmp.eq.s32.totalorder %s12, 3
      %p43 = por %p41, %p42
      %p44 = scmp.ne.s32.totalorder %s36, %s39
      %p45 = scmp.eq.s32.totalorder %s12, 0
      %p46 = por %p44, %p45
      %p47 = scmp.ne.s32.totalorder %s36, %s39
      %p48 = scmp.eq.s32.totalorder %s17, 3
      %p49 = por %p47, %p48
      %p50 = scmp.ne.s32.totalorder %s39, %s40
      %p51 = scmp.eq.s32.totalorder %s17, 0
      %p52 = por %p50, %p51
      %p53 = scmp.ne.s32.totalorder %s39, %s40
      %p54 = scmp.eq.s32.totalorder %s18, 3
      %p55 = por %p53, %p54
      %p57 = scmp.ne.s32.totalorder %s40, %s56
      %p58 = scmp.eq.s32.totalorder %s18, 0
      %p59 = por %p57, %p58
      %s60 = ssub.s32 %s19, %s31
      %p61 = scmp.eq.s32.totalorder %s60, 0
      %s63 = sadd.s32 %s62, 1
      %s64 = scalar_select %p61, %s62, %s63
      %p67 = pneg %p61
      %p68 = scmp.eq.s32.totalorder %s12, 3
      %p69 = por %p67, %p68
      %p70 = scmp.ne.s32.totalorder %s62, %s65
      %p71 = scmp.eq.s32.totalorder %s12, 0
      %p72 = por %p70, %p71
      %p73 = scmp.ne.s32.totalorder %s62, %s65
      %p74 = scmp.eq.s32.totalorder %s17, 3
      %p75 = por %p73, %p74
      %p76 = scmp.ne.s32.totalorder %s65, %s66
      %p77 = scmp.eq.s32.totalorder %s17, 0
      %p78 = por %p76, %p77
      %p79 = scmp.ne.s32.totalorder %s65, %s66
      %p80 = scmp.eq.s32.totalorder %s18, 3
      %p81 = por %p79, %p80
      %p83 = scmp.ne.s32.totalorder %s66, %s82
      %p84 = scmp.eq.s32.totalorder %s18, 0
      %p85 = por %p83, %p84
      %s87 = sadd.s32 %s86, 1
      %p90 = scmp.eq.s32.totalorder %s12, 3
      %p91 = scmp.ne.s32.totalorder %s86, %s88
      %p92 = scmp.eq.s32.totalorder %s12, 0
      %p93 = por %p91, %p92
      %p94 = scmp.ne.s32.totalorder %s86, %s88
      %p95 = scmp.eq.s32.totalorder %s17, 3
      %p96 = por %p94, %p95
      %p97 = scmp.ne.s32.totalorder %s88, %s89
      %p98 = scmp.eq.s32.totalorder %s17, 0
      %p99 = por %p97, %p98
      %p100 = scmp.ne.s32.totalorder %s88, %s89
      %p101 = scmp.eq.s32.totalorder %s18, 3
      %p102 = por %p100, %p101
      %p104 = scmp.ne.s32.totalorder %s89, %s103
      %p105 = scmp.eq.s32.totalorder %s18, 0
      %p106 = por %p104, %p105
      %s108 = sadd.s32 %s107, 1
      %p111 = scmp.eq.s32.totalorder %s12, 3
      %p112 = scmp.ne.s32.totalorder %s107, %s109
      %p113 = scmp.eq.s32.totalorder %s12, 0
      %p114 = por %p112, %p113
      %p115 = scmp.ne.s32.totalorder %s107, %s109
      %p116 = scmp.eq.s32.totalorder %s17, 3
      %p117 = por %p115, %p116
      %p118 = scmp.ne.s32.totalorder %s109, %s110
      %p119 = scmp.eq.s32.totalorder %s17, 0
      %p120 = por %p118, %p119
      %p121 = scmp.ne.s32.totalorder %s109, %s110
      %p122 = scmp.eq.s32.totalorder %s18, 3
      %p123 = por %p121, %p122
      %p125 = scmp.ne.s32.totalorder %s110, %s124
      %p126 = scmp.eq.s32.totalorder %s18, 0
      %p127 = por %p125, %p126
      %s129 = sadd.s32 %s128, 1
      %p132 = scmp.eq.s32.totalorder %s12, 3
      %p133 = scmp.ne.s32.totalorder %s128, %s130
      %p134 = scmp.eq.s32.totalorder %s12, 0
      %p135 = por %p133, %p134
      %p136 = scmp.ne.s32.totalorder %s128, %s130
      %p137 = scmp.eq.s32.totalorder %s17, 3
      %p138 = por %p136, %p137
      %p139 = scmp.ne.s32.totalorder %s130, %s131
      %p140 = scmp.eq.s32.totalorder %s17, 0
      %p141 = por %p139, %p140
      %p142 = scmp.ne.s32.totalorder %s130, %s131
      %p143 = scmp.eq.s32.totalorder %s18, 3
      %p144 = por %p142, %p143
      %p146 = scmp.ne.s32.totalorder %s131, %s145
      %p147 = scmp.eq.s32.totalorder %s18, 0
      %p148 = por %p146, %p147
      %s150 = sadd.s32 %s149, 1
      %p153 = scmp.eq.s32.totalorder %s12, 3
      %p154 = scmp.ne.s32.totalorder %s149, %s151
      %p155 = scmp.eq.s32.totalorder %s12, 0
      %p156 = por %p154, %p155
      %p157 = scmp.ne.s32.totalorder %s149, %s151
      %p158 = scmp.eq.s32.totalorder %s17, 3
      %p159 = por %p157, %p158
      %p160 = scmp.ne.s32.totalorder %s151, %s152
      %p161 = scmp.eq.s32.totalorder %s17, 0
      %p162 = por %p160, %p161
      %p163 = scmp.ne.s32.totalorder %s151, %s152
      %p164 = scmp.eq.s32.totalorder %s18, 3
      %p165 = por %p163, %p164
      %p167 = scmp.ne.s32.totalorder %s152, %s166
      %p168 = scmp.eq.s32.totalorder %s18, 0
      %p169 = por %p167, %p168
      %s170 = ssub.s32 %s19, %s31
      %s171 = ssub.s32 %s20, %s27
      %s172 = sor.u32 %s170, %s171
      %p173 = scmp.eq.s32.totalorder %s172, 0
      %s175 = sadd.s32 %s174, 1
      %s176 = scalar_select %p173, %s174, %s175
      %p179 = pneg %p173
      %p180 = scmp.eq.s32.totalorder %s12, 3
      %p181 = por %p179, %p180
      %p182 = scmp.ne.s32.totalorder %s174, %s177
      %p183 = scmp.eq.s32.totalorder %s12, 0
      %p184 = por %p182, %p183
      %p185 = scmp.ne.s32.totalorder %s174, %s177
      %p186 = scmp.eq.s32.totalorder %s17, 3
      %p187 = por %p185, %p186
      %p188 = scmp.ne.s32.totalorder %s177, %s178
      %p189 = scmp.eq.s32.totalorder %s17, 0
      %p190 = por %p188, %p189
      %p191 = scmp.ne.s32.totalorder %s177, %s178
      %p192 = scmp.eq.s32.totalorder %s18, 3
      %p193 = por %p191, %p192
      %p195 = scmp.ne.s32.totalorder %s178, %s194
      %p196 = scmp.eq.s32.totalorder %s18, 0
      %p197 = por %p195, %p196
      %p198 = scmp.le.s32.totalorder 1, %s12
      %p199 = scmp.lt.s32.totalorder %s12, 5
      %p200 = pnand %p198, %p199
      %p201 = pneg %p200
      // Predicated region
      $region9: #{resnet_attn_forward.3} parent=5 // pred_check
        _
      $region10: #{resnet_attn_forward.3} parent=5 // pred_check_branch
        %203 = sbr.rel (%p200) target = $region12
      $region11: #{resnet_attn_forward.3} parent=5 // pred_region
        %s204 = ssub.s32 %s12, 1
        // Predicated region
        $region13: #{resnet_attn_forward.3} parent=11 // pred_check
          %p205 = pneg %p99
        $region14: #{resnet_attn_forward.3} parent=11 // pred_check_branch
          %207 = sbr.rel (%p205) target = $region16
        $region15: #{resnet_attn_forward.3} parent=11 // pred_region
          _
        $region16: #{resnet_attn_forward.3} parent=11 // pred_fallthru
          _
        // Predicated region
        $region17: #{resnet_attn_forward.3} parent=11 // pred_check
          %p208 = pneg %p120
        $region18: #{resnet_attn_forward.3} parent=11 // pred_check_branch
          %210 = sbr.rel (%p208) target = $region20
        $region19: #{resnet_attn_forward.3} parent=11 // pred_region
          _
        $region20: #{resnet_attn_forward.3} parent=11 // pred_fallthru
          _
        // Predicated region
        $region21: #{resnet_attn_forward.3} parent=11 // pred_check
          %p211 = pneg %p141
        $region22: #{resnet_attn_forward.3} parent=11 // pred_check_branch
          %213 = sbr.rel (%p211) target = $region24
        $region23: #{resnet_attn_forward.3} parent=11 // pred_region
          _
        $region24: #{resnet_attn_forward.3} parent=11 // pred_fallthru
          _
        // Predicated region
        $region25: #{resnet_attn_forward.3} parent=11 // pred_check
          %p214 = pneg %p162
        $region26: #{resnet_attn_forward.3} parent=11 // pred_check_branch
          %216 = sbr.rel (%p214) target = $region28
        $region27: #{resnet_attn_forward.3} parent=11 // pred_region
          _
        $region28: #{resnet_attn_forward.3} parent=11 // pred_fallthru
          _
      $region12: #{resnet_attn_forward.3} parent=5 // pred_fallthru
        _
      %p217 = scmp.lt.s32.totalorder %s12, 4
      // Predicated region
      $region29: #{resnet_attn_forward.3} parent=5 // pred_check
        %p218 = pneg %p217
      $region30: #{resnet_attn_forward.3} parent=5 // pred_check_branch
        %220 = sbr.rel (%p218) target = $region32
      $region31: #{resnet_attn_forward.3} parent=5 // pred_region
        // Predicated region
        $region33: #{resnet_attn_forward.3} parent=31 // pred_check
          %p221 = pneg %p46
        $region34: #{resnet_attn_forward.3} parent=31 // pred_check_branch
          %223 = sbr.rel (%p221) target = $region36
        $region35: #{resnet_attn_forward.3} parent=31 // pred_region
          %s224 = sand.u32 %s36, 1
          %s225 = sand.u32 %s36, 1
          %s226 = smul.addr %s225, 8
          %s227 = scalar_lea.vmem [#allocation2], %s226
          %s228 = smul.addr %s19, 4
          %s229 = sadd.s32 %s20, %s228
          %s230 = smul.addr %s229, 4
          %s231 = scalar_lea.vmem %s0, %s230
          // Predicated region
          $region37: #{resnet_attn_forward.3} parent=35 // pred_check
            _
          $region38: #{resnet_attn_forward.3} parent=35 // pred_check_branch
            %233 = sbr.rel (0) target = $region40
          $region39: #{resnet_attn_forward.3} parent=35 // pred_region
            // Predicated region
            $region41: #{resnet_attn_forward.3} parent=39 // pred_check
              _
            $region42: #{resnet_attn_forward.3} parent=39 // pred_check_branch
              %235 = sbr.rel target = $region44
            $region43: #{resnet_attn_forward.3} parent=39 // pred_region
              // Predicated region
              $region56: #{resnet_attn_forward.3} parent=43 // pred_check
                _
              $region57: #{resnet_attn_forward.3} parent=43 // pred_check_branch
                %252 = sbr.rel (0) target = $region59
              $region58: #{resnet_attn_forward.3} parent=43 // pred_region
                loop: start=0, step=1, limit=1
                $region60: #{resnet_attn_forward.3} parent=58 // loop_pre_header
                  _
                $region61: #{resnet_attn_forward.3} parent=58 // loop_header
                  %s254 = sphi 0, %s258
                  %p255 = scmp.ge.s32.totalorder %s254, 1
                  %s259 = sphi %s231, %s231
                  %s260 = sphi %s227, %s227
                $region62: #{resnet_attn_forward.3} parent=58 // loop_header_branch
                  %257 = sbr.rel (%p255) target = $region66
                $region63: #{resnet_attn_forward.3} parent=58 // loop_body
                  _
                $region64: #{resnet_attn_forward.3} parent=58 // loop_footer
                  %s258 = sadd.s32 1, %s254
                $region65: #{resnet_attn_forward.3} parent=58 // loop_footer_branch
                  %253 = sbr.rel target = $region61
                $region66: #{resnet_attn_forward.3} parent=58 // loop_exit
                  _
                loop: start=0, step=1, limit=1
                $region67: #{resnet_attn_forward.3} parent=58 // loop_pre_header
                  _
                $region68: #{resnet_attn_forward.3} parent=58 // loop_header
                  %s263 = sphi 0, %s267
                  %p264 = scmp.ge.s32.totalorder %s263, 1
                  %s268 = sphi %s231, %s231
                  %s269 = sphi %s227, %s227
                $region69: #{resnet_attn_forward.3} parent=58 // loop_header_branch
                  %266 = sbr.rel (%p264) target = $region73
                $region70: #{resnet_attn_forward.3} parent=58 // loop_body
                  %v270 = vld [vmem:[%s268] sm:$0xf]
                  %271 = vst [vmem:[%s269] sm:$0xf] %v270
                  %v272 = vld [vmem:[%s268 + $0x8] sm:$0xf]
                  %273 = vst [vmem:[%s269 + $0x4] sm:$0xf] %v272
                $region71: #{resnet_attn_forward.3} parent=58 // loop_footer
                  %s267 = sadd.s32 1, %s263
                $region72: #{resnet_attn_forward.3} parent=58 // loop_footer_branch
                  %262 = sbr.rel target = $region68
                $region73: #{resnet_attn_forward.3} parent=58 // loop_exit
                  _
              $region59: #{resnet_attn_forward.3} parent=43 // pred_fallthru
                _
            $region44: #{resnet_attn_forward.3} parent=39 // pred_fallthru
              _
            // Predicated region
            $region45: #{resnet_attn_forward.3} parent=39 // pred_check
              _
            $region46: #{resnet_attn_forward.3} parent=39 // pred_check_branch
              %237 = sbr.rel (0) target = $region48
            $region47: #{resnet_attn_forward.3} parent=39 // pred_region
              loop: start=0, step=1, limit=1
              $region49: #{resnet_attn_forward.3} parent=47 // loop_pre_header
                _
              $region50: #{resnet_attn_forward.3} parent=47 // loop_header
                %s240 = sphi 0, %s244
                %p241 = scmp.ge.s32.totalorder %s240, 1
                %s245 = sphi %s231, %s231
                %s246 = sphi %s227, %s227
              $region51: #{resnet_attn_forward.3} parent=47 // loop_header_branch
                %243 = sbr.rel (%p241) target = $region55
              $region52: #{resnet_attn_forward.3} parent=47 // loop_body
                %v247 = vld [vmem:[%s245] sm:$0xf]
                %248 = vst [vmem:[%s246] sm:$0xf] %v247
                %v249 = vld [vmem:[%s245 + $0x8] sm:$0xf]
                %250 = vst [vmem:[%s246 + $0x4] sm:$0xf] %v249
              $region53: #{resnet_attn_forward.3} parent=47 // loop_footer
                %s244 = sadd.s32 1, %s240
              $region54: #{resnet_attn_forward.3} parent=47 // loop_footer_branch
                %239 = sbr.rel target = $region50
              $region55: #{resnet_attn_forward.3} parent=47 // loop_exit
                _
            $region48: #{resnet_attn_forward.3} parent=39 // pred_fallthru
              _
          $region40: #{resnet_attn_forward.3} parent=35 // pred_fallthru
            _
          %274 = vnop
        $region36: #{resnet_attn_forward.3} parent=31 // pred_fallthru
          _
        // Predicated region
        $region74: #{resnet_attn_forward.3} parent=31 // pred_check
          %p275 = pneg %p72
        $region75: #{resnet_attn_forward.3} parent=31 // pred_check_branch
          %277 = sbr.rel (%p275) target = $region77
        $region76: #{resnet_attn_forward.3} parent=31 // pred_region
          %p278 = scmp.lt.s32.totalorder %s19, 1
          %s279 = scalar_select %p278, %s19, 1
          %s280 = smul.addr %s279, 2
          %s281 = smul.addr %s280, 8
          %s282 = scalar_lea.vmem %s1, %s281
        $region77: #{resnet_attn_forward.3} parent=31 // pred_fallthru
          _
      $region32: #{resnet_attn_forward.3} parent=5 // pred_fallthru
        _
      %p283 = scmp.le.s32.totalorder 1, %s12
      %p284 = scmp.lt.s32.totalorder %s12, 5
      %p285 = pnand %p283, %p284
      %p286 = pneg %p285
      // Predicated region
      $region78: #{resnet_attn_forward.3} parent=5 // pred_check
        _
      $region79: #{resnet_attn_forward.3} parent=5 // pred_check_branch
        %288 = sbr.rel (%p285) target = $region81
      $region80: #{resnet_attn_forward.3} parent=5 // pred_region
        %s289 = ssub.s32 %s12, 1
        %s290 = sand.u32 %s39, 1
        %s291 = sand.u32 %s39, 1
        %s292 = smul.addr %s291, 8
        %s293 = scalar_lea.vmem [#allocation2], %s292
        // Predicated region
        $region82: #{resnet_attn_forward.3} parent=80 // pred_check
          %p294 = pneg %p52
        $region83: #{resnet_attn_forward.3} parent=80 // pred_check_branch
          %296 = sbr.rel (%p294) target = $region85
        $region84: #{resnet_attn_forward.3} parent=80 // pred_region
          _
        $region85: #{resnet_attn_forward.3} parent=80 // pred_fallthru
          _
        %s297 = sand.u32 %s39, 1
        %s298 = sand.u32 %s39, 1
        %s299 = smul.addr %s298, 8
        %s300 = scalar_lea.vmem [#allocation2], %s299
        %p301 = pneg %p52
        %p302 = pneg %p49
        %p303 = scmp.lt.s32.totalorder %s21, 1
        %s304 = scalar_select %p303, %s21, 1
        %s305 = smul.addr %s304, 2
        %s306 = smul.addr %s305, 8
        %s307 = scalar_lea.vmem %s1, %s306
        %p308 = pneg %p78
        %p309 = pneg %p75
        %p310 = pneg %p99
        %p311 = pneg %p96
        %p312 = pneg %p120
        %p313 = pneg %p117
        %p314 = pneg %p141
        %p315 = pneg %p138
        %p316 = pneg %p162
        %p317 = pneg %p159
        %p318 = pneg %p190
        %p319 = pneg %p187
        %p320 = scmp.lt.s32.totalorder %s21, 1
        %s321 = scalar_select %p320, %s21, 1
        %p322 = scmp.lt.s32.totalorder %s22, 1
        %s323 = scalar_select %p322, %s22, 1
        %s324 = smul.addr %s321, 2
        %s325 = sadd.s32 %s323, %s324
        %s326 = smul.addr %s325, 8
        %s327 = scalar_lea.vmem %s6, %s326
        %p328 = scmp.lt.s32.totalorder %s21, 1
        %s329 = scalar_select %p328, %s21, 1
        %s330 = smul.addr %s329, 2
        %s331 = smul.addr %s330, 8
        %s332 = scalar_lea.vmem %s1, %s331
        %p333 = scmp.lt.s32.totalorder %s21, 1
        %s334 = scalar_select %p333, %s21, 1
        %p335 = scmp.lt.s32.totalorder %s22, 1
        %s336 = scalar_select %p335, %s22, 1
        %s337 = smul.addr %s334, 2
        %s338 = sadd.s32 %s336, %s337
        %s339 = smul.addr %s338, 8
        %s340 = scalar_lea.vmem %s6, %s339
        %v341 = vld [vmem:[%s293] sm:$0xf]
        %v342 = vld [vmem:[%s293 + $0x4] sm:$0xf]
        %v343 = vunpack.c.l.bf16 %v341
        %v344 = vunpack.c.l.bf16 %v342
        %v345 = vld [vmem:[%s5] sm:$0xff]
        %v346 = vld [vmem:[%s5 + $0x8] sm:$0xff]
        %v347 = vld [vmem:[%s2] sm:$0xff]
        %v348 = vld [vmem:[%s2 + $0x8] sm:$0xff]
        %v349 = vld [vmem:[%s2 + $0x30] sm:$0xff]
        %v350 = vld [vmem:[%s2 + $0x38] sm:$0xff]
        %352 = vset.pattern.permute.xlu0 0
        %353 = vperm.xlu0 %352, %v345
        %v354 = vpop.permute.xlu0 %353
        %357 = vset.pattern.permute.xlu0 0
        %358 = vperm.xlu0 %357, %v346
        %v359 = vpop.permute.xlu0 %358
        %vm361 = vcmask 130048
        %v363 = vsel %vm361, %v347, 0
        %v366 = vsel %vm361, %v348, 0
        %368 = vmatprep.subr.mxu0 0.0
        %369 = vmatpush1.msra.mxu0 %v343
        %370 = vmatprep.subr.mxu0 0.0
        %371 = vmatpush1.msra.mxu0 %v344
        %372 = vmatprep.subr.mxu0 0.0
        %373 = vmatpush1.msra.mxu0 0.0
        %374 = vmatprep.subr.mxu0 0.0
        %375 = vmatpush1.msra.mxu0 0.0
        %376 = vmatprep.subr.mxu0 0.0
        %377 = vmatpush1.msra.mxu0 0.0
        %378 = vmatprep.subr.mxu0 0.0
        %379 = vmatpush1.msra.mxu0 0.0
        %380 = vmatprep.subr.mxu0 0.0
        %381 = vmatpush1.msra.mxu0 0.0
        %382 = vmatprep.subr.mxu0 0.0
        %383 = vmatpush1.msra.mxu0 0.0
        %384 = vmatprep.subr.mxu0 0.0
        %385 = vmatpush1.msra.mxu0 0.0
        %386 = vmatprep.subr.mxu0 0.0
        %387 = vmatpush1.msra.mxu0 0.0
        %388 = vmatprep.subr.mxu0 0.0
        %389 = vmatpush1.msra.mxu0 0.0
        %390 = vmatprep.subr.mxu0 0.0
        %391 = vmatpush1.msra.mxu0 0.0
        %392 = vmatprep.subr.mxu0 0.0
        %393 = vmatpush1.msra.mxu0 0.0
        %394 = vmatprep.subr.mxu0 0.0
        %395 = vmatpush1.msra.mxu0 0.0
        %396 = vmatprep.subr.mxu0 0.0
        %397 = vmatpush1.msra.mxu0 0.0
        %398 = vmatprep.subr.mxu0 0.0
        %399 = vmatpush1.msra.mxu0 0.0
        %400 = vmatprep.subr.mxu0 0.0
        %401 = vmatpush1.msra.mxu0 0.0
        %402 = vmatprep.subr.mxu0 0.0
        %403 = vmatpush1.msra.mxu0 0.0
        %404 = vmatprep.subr.mxu0 0.0
        %405 = vmatpush1.msra.mxu0 0.0
        %406 = vmatprep.subr.mxu0 0.0
        %407 = vmatpush1.msra.mxu0 0.0
        %408 = vmatprep.subr.mxu0 0.0
        %409 = vmatpush1.msra.mxu0 0.0
        %410 = vmatprep.subr.mxu0 0.0
        %411 = vmatpush1.msra.mxu0 0.0
        %412 = vmatprep.subr.mxu0 0.0
        %413 = vmatpush1.msra.mxu0 0.0
        %414 = vmatprep.subr.mxu0 0.0
        %415 = vmatpush1.msra.mxu0 0.0
        %416 = vmatprep.subr.mxu0 0.0
        %417 = vmatpush1.msra.mxu0 0.0
        %418 = vmatprep.subr.mxu0 0.0
        %419 = vmatpush1.msra.mxu0 0.0
        %420 = vmatprep.subr.mxu0 0.0
        %421 = vmatpush1.msra.mxu0 0.0
        %422 = vmatprep.subr.mxu0 0.0
        %423 = vmatpush1.msra.mxu0 0.0
        %424 = vmatprep.subr.mxu0 0.0
        %425 = vmatpush1.msra.mxu0 0.0
        %426 = vmatprep.subr.mxu0 0.0
        %427 = vmatpush1.msra.mxu0 0.0
        %428 = vmatprep.subr.mxu0 0.0
        %429 = vmatpush1.msra.mxu0 0.0
        %430 = vmatprep.subr.mxu0 0.0
        %431 = vmatpush1.msra.mxu0 0.0
        %432 = vmatprep.mubr.f32.mxu0 0.0
        %433 = vmatmul.mubr.f32.gmra.mrb[0].mxu0 %v363
        %v434 = vpop.f32.mrb[0].mxu0
        %v435 = vadd.f32 %v354, %v434
        %v436 = vpop.f32.mrb[0].mxu0
        %437 = vmatprep.mubr.f32.mxu0 0.0
        %438 = vmatmul.mubr.f32.gmra.mrb[0].mxu0 %v366
        %v439 = vpop.f32.mrb[0].mxu0
        %v440 = vadd.f32 %v359, %v439
        %v441 = vpop.f32.mrb[0].mxu0
        %442 = vdwg.mxu0
        %v443 = vmax.f32 %v435, %v440
        %v444 = vrot.slane %v443, 4
        %v445 = vmax.f32 %v443, %v444
        %v446 = vrot.slane %v445, 2
        %v447 = vmax.f32 %v445, %v446
        %v448 = vrot.slane %v447, 1
        %v449 = vmax.f32 %v447, %v448
        %v450 = vsub.f32 %v435, %v449
        %v451 = vsub.f32 %v440, %v449
        %v452 = vmul.f32 %v450, 1.442695
        %v453 = vpow.pop %v452
        %v454 = vmul.f32 %v451, 1.442695
        %v455 = vpow.pop %v454
        %v456 = vld [vmem:[%s4] sm:$0xff]
        %v457 = vld [vmem:[%s4 + $0x8] sm:$0xff]
        %v459 = vsel %vm361, %v456, 0
        %v462 = vsel %vm361, %v457, 0
        %464 = vmatprep.subr.mxu0 0.0
        %465 = vmatpush1.msra.mxu0 %v453
        %466 = vmatprep.subr.mxu0 0.0
        %467 = vmatpush1.msra.mxu0 %v455
        %468 = vmatprep.subr.mxu0 0.0
        %469 = vmatpush1.msra.mxu0 0.0
        %470 = vmatprep.subr.mxu0 0.0
        %471 = vmatpush1.msra.mxu0 0.0
        %472 = vmatprep.subr.mxu0 0.0
        %473 = vmatpush1.msra.mxu0 0.0
        %474 = vmatprep.subr.mxu0 0.0
        %475 = vmatpush1.msra.mxu0 0.0
        %476 = vmatprep.subr.mxu0 0.0
        %477 = vmatpush1.msra.mxu0 0.0
        %478 = vmatprep.subr.mxu0 0.0
        %479 = vmatpush1.msra.mxu0 0.0
        %480 = vmatprep.subr.mxu0 0.0
        %481 = vmatpush1.msra.mxu0 0.0
        %482 = vmatprep.subr.mxu0 0.0
        %483 = vmatpush1.msra.mxu0 0.0
        %484 = vmatprep.subr.mxu0 0.0
        %485 = vmatpush1.msra.mxu0 0.0
        %486 = vmatprep.subr.mxu0 0.0
        %487 = vmatpush1.msra.mxu0 0.0
        %488 = vmatprep.subr.mxu0 0.0
        %489 = vmatpush1.msra.mxu0 0.0
        %490 = vmatprep.subr.mxu0 0.0
        %491 = vmatpush1.msra.mxu0 0.0
        %492 = vmatprep.subr.mxu0 0.0
        %493 = vmatpush1.msra.mxu0 0.0
        %494 = vmatprep.subr.mxu0 0.0
        %495 = vmatpush1.msra.mxu0 0.0
        %496 = vmatprep.subr.mxu0 0.0
        %497 = vmatpush1.msra.mxu0 0.0
        %498 = vmatprep.subr.mxu0 0.0
        %499 = vmatpush1.msra.mxu0 0.0
        %500 = vmatprep.subr.mxu0 0.0
        %501 = vmatpush1.msra.mxu0 0.0
        %502 = vmatprep.subr.mxu0 0.0
        %503 = vmatpush1.msra.mxu0 0.0
        %504 = vmatprep.subr.mxu0 0.0
        %505 = vmatpush1.msra.mxu0 0.0
        %506 = vmatprep.subr.mxu0 0.0
        %507 = vmatpush1.msra.mxu0 0.0
        %508 = vmatprep.subr.mxu0 0.0
        %509 = vmatpush1.msra.mxu0 0.0
        %510 = vmatprep.subr.mxu0 0.0
        %511 = vmatpush1.msra.mxu0 0.0
        %512 = vmatprep.subr.mxu0 0.0
        %513 = vmatpush1.msra.mxu0 0.0
        %514 = vmatprep.subr.mxu0 0.0
        %515 = vmatpush1.msra.mxu0 0.0
        %516 = vmatprep.subr.mxu0 0.0
        %517 = vmatpush1.msra.mxu0 0.0
        %518 = vmatprep.subr.mxu0 0.0
        %519 = vmatpush1.msra.mxu0 0.0
        %520 = vmatprep.subr.mxu0 0.0
        %521 = vmatpush1.msra.mxu0 0.0
        %522 = vmatprep.subr.mxu0 0.0
        %523 = vmatpush1.msra.mxu0 0.0
        %524 = vmatprep.subr.mxu0 0.0
        %525 = vmatpush1.msra.mxu0 0.0
        %526 = vmatprep.subr.mxu0 0.0
        %527 = vmatpush1.msra.mxu0 0.0
        %528 = vmatprep.mubr.f32.mxu0 0.0
        %529 = vmatmul.mubr.f32.gmra.mrb[0].mxu0 %v459
        %v530 = vpop.f32.mrb[0].mxu0
        %v531 = vadd.f32 0.0, %v530
        %v532 = vpop.f32.mrb[0].mxu0
        %533 = vmatprep.mubr.f32.mxu0 0.0
        %534 = vmatmul.mubr.f32.gmra.mrb[0].mxu0 %v462
        %v535 = vpop.f32.mrb[0].mxu0
        %v536 = vadd.f32 0.0, %v535
        %v537 = vpop.f32.mrb[0].mxu0
        %538 = vdwg.mxu0
        %v539 = vrcp.pop %v531
        %v540 = vrcp.pop %v536
        %v541 = vmul.f32 %v453, %v539
        %v542 = vmul.f32 %v455, %v540
        %v543 = vld [vmem:[%s332] sm:$0xff]
        %v544 = vld [vmem:[%s332 + $0x8] sm:$0xff]
        %v546 = vsel %vm361, %v543, 0
        %v549 = vsel %vm361, %v544, 0
        %551 = vmatprep.subr.mxu0 0.0
        %552 = vmatpush1.msra.mxu0 %v541
        %553 = vmatprep.subr.mxu0 0.0
        %554 = vmatpush1.msra.mxu0 %v542
        %555 = vmatprep.subr.mxu0 0.0
        %556 = vmatpush1.msra.mxu0 0.0
        %557 = vmatprep.subr.mxu0 0.0
        %558 = vmatpush1.msra.mxu0 0.0
        %559 = vmatprep.subr.mxu0 0.0
        %560 = vmatpush1.msra.mxu0 0.0
        %561 = vmatprep.subr.mxu0 0.0
        %562 = vmatpush1.msra.mxu0 0.0
        %563 = vmatprep.subr.mxu0 0.0
        %564 = vmatpush1.msra.mxu0 0.0
        %565 = vmatprep.subr.mxu0 0.0
        %566 = vmatpush1.msra.mxu0 0.0
        %567 = vmatprep.subr.mxu0 0.0
        %568 = vmatpush1.msra.mxu0 0.0
        %569 = vmatprep.subr.mxu0 0.0
        %570 = vmatpush1.msra.mxu0 0.0
        %571 = vmatprep.subr.mxu0 0.0
        %572 = vmatpush1.msra.mxu0 0.0
        %573 = vmatprep.subr.mxu0 0.0
        %574 = vmatpush1.msra.mxu0 0.0
        %575 = vmatprep.subr.mxu0 0.0
        %576 = vmatpush1.msra.mxu0 0.0
        %577 = vmatprep.subr.mxu0 0.0
        %578 = vmatpush1.msra.mxu0 0.0
        %579 = vmatprep.subr.mxu0 0.0
        %580 = vmatpush1.msra.mxu0 0.0
        %581 = vmatprep.subr.mxu0 0.0
        %582 = vmatpush1.msra.mxu0 0.0
        %583 = vmatprep.subr.mxu0 0.0
        %584 = vmatpush1.msra.mxu0 0.0
        %585 = vmatprep.subr.mxu0 0.0
        %586 = vmatpush1.msra.mxu0 0.0
        %587 = vmatprep.subr.mxu0 0.0
        %588 = vmatpush1.msra.mxu0 0.0
        %589 = vmatprep.subr.mxu0 0.0
        %590 = vmatpush1.msra.mxu0 0.0
        %591 = vmatprep.subr.mxu0 0.0
        %592 = vmatpush1.msra.mxu0 0.0
        %593 = vmatprep.subr.mxu0 0.0
        %594 = vmatpush1.msra.mxu0 0.0
        %595 = vmatprep.subr.mxu0 0.0
        %596 = vmatpush1.msra.mxu0 0.0
        %597 = vmatprep.subr.mxu0 0.0
        %598 = vmatpush1.msra.mxu0 0.0
        %599 = vmatprep.subr.mxu0 0.0
        %600 = vmatpush1.msra.mxu0 0.0
        %601 = vmatprep.subr.mxu0 0.0
        %602 = vmatpush1.msra.mxu0 0.0
        %603 = vmatprep.subr.mxu0 0.0
        %604 = vmatpush1.msra.mxu0 0.0
        %605 = vmatprep.subr.mxu0 0.0
        %606 = vmatpush1.msra.mxu0 0.0
        %607 = vmatprep.subr.mxu0 0.0
        %608 = vmatpush1.msra.mxu0 0.0
        %609 = vmatprep.subr.mxu0 0.0
        %610 = vmatpush1.msra.mxu0 0.0
        %611 = vmatprep.subr.mxu0 0.0
        %612 = vmatpush1.msra.mxu0 0.0
        %613 = vmatprep.subr.mxu0 0.0
        %614 = vmatpush1.msra.mxu0 0.0
        %615 = vmatprep.mubr.f32.mxu0 0.0
        %616 = vmatmul.mubr.f32.gmra.mrb[0].mxu0 %v546
        %v617 = vpop.f32.mrb[0].mxu0
        %v618 = vadd.f32 0.0, %v617
        %v619 = vpop.f32.mrb[0].mxu0
        %620 = vmatprep.mubr.f32.mxu0 0.0
        %621 = vmatmul.mubr.f32.gmra.mrb[0].mxu0 %v549
        %v622 = vpop.f32.mrb[0].mxu0
        %v623 = vadd.f32 0.0, %v622
        %v624 = vpop.f32.mrb[0].mxu0
        %625 = vdwg.mxu0
        %626 = vset.pattern.permute.xlu0 3
        %627 = vperm.xlu0 %626, %v345
        %v628 = vpop.permute.xlu0 %627
        %630 = vset.pattern.permute.xlu0 3
        %631 = vperm.xlu0 %630, %v346
        %v632 = vpop.permute.xlu0 %631
        %v635 = vsel %vm361, %v349, 0
        %v638 = vsel %vm361, %v350, 0
        %640 = vmatprep.subr.mxu0 0.0
        %641 = vmatpush1.msra.mxu0 %v618
        %642 = vmatprep.subr.mxu0 0.0
        %643 = vmatpush1.msra.mxu0 %v623
        %644 = vmatprep.subr.mxu0 0.0
        %645 = vmatpush1.msra.mxu0 0.0
        %646 = vmatprep.subr.mxu0 0.0
        %647 = vmatpush1.msra.mxu0 0.0
        %648 = vmatprep.subr.mxu0 0.0
        %649 = vmatpush1.msra.mxu0 0.0
        %650 = vmatprep.subr.mxu0 0.0
        %651 = vmatpush1.msra.mxu0 0.0
        %652 = vmatprep.subr.mxu0 0.0
        %653 = vmatpush1.msra.mxu0 0.0
        %654 = vmatprep.subr.mxu0 0.0
        %655 = vmatpush1.msra.mxu0 0.0
        %656 = vmatprep.subr.mxu0 0.0
        %657 = vmatpush1.msra.mxu0 0.0
        %658 = vmatprep.subr.mxu0 0.0
        %659 = vmatpush1.msra.mxu0 0.0
        %660 = vmatprep.subr.mxu0 0.0
        %661 = vmatpush1.msra.mxu0 0.0
        %662 = vmatprep.subr.mxu0 0.0
        %663 = vmatpush1.msra.mxu0 0.0
        %664 = vmatprep.subr.mxu0 0.0
        %665 = vmatpush1.msra.mxu0 0.0
        %666 = vmatprep.subr.mxu0 0.0
        %667 = vmatpush1.msra.mxu0 0.0
        %668 = vmatprep.subr.mxu0 0.0
        %669 = vmatpush1.msra.mxu0 0.0
        %670 = vmatprep.subr.mxu0 0.0
        %671 = vmatpush1.msra.mxu0 0.0
        %672 = vmatprep.subr.mxu0 0.0
        %673 = vmatpush1.msra.mxu0 0.0
        %674 = vmatprep.subr.mxu0 0.0
        %675 = vmatpush1.msra.mxu0 0.0
        %676 = vmatprep.subr.mxu0 0.0
        %677 = vmatpush1.msra.mxu0 0.0
        %678 = vmatprep.subr.mxu0 0.0
        %679 = vmatpush1.msra.mxu0 0.0
        %680 = vmatprep.subr.mxu0 0.0
        %681 = vmatpush1.msra.mxu0 0.0
        %682 = vmatprep.subr.mxu0 0.0
        %683 = vmatpush1.msra.mxu0 0.0
        %684 = vmatprep.subr.mxu0 0.0
        %685 = vmatpush1.msra.mxu0 0.0
        %686 = vmatprep.subr.mxu0 0.0
        %687 = vmatpush1.msra.mxu0 0.0
        %688 = vmatprep.subr.mxu0 0.0
        %689 = vmatpush1.msra.mxu0 0.0
        %690 = vmatprep.subr.mxu0 0.0
        %691 = vmatpush1.msra.mxu0 0.0
        %692 = vmatprep.subr.mxu0 0.0
        %693 = vmatpush1.msra.mxu0 0.0
        %694 = vmatprep.subr.mxu0 0.0
        %695 = vmatpush1.msra.mxu0 0.0
        %696 = vmatprep.subr.mxu0 0.0
        %697 = vmatpush1.msra.mxu0 0.0
        %698 = vmatprep.subr.mxu0 0.0
        %699 = vmatpush1.msra.mxu0 0.0
        %700 = vmatprep.subr.mxu0 0.0
        %701 = vmatpush1.msra.mxu0 0.0
        %702 = vmatprep.subr.mxu0 0.0
        %703 = vmatpush1.msra.mxu0 0.0
        %704 = vmatprep.mubr.f32.mxu0 0.0
        %705 = vmatmul.mubr.f32.gmra.mrb[0].mxu0 %v635
        %v706 = vpop.f32.mrb[0].mxu0
        %v707 = vadd.f32 %v628, %v706
        %v708 = vpop.f32.mrb[0].mxu0
        %709 = vmatprep.mubr.f32.mxu0 0.0
        %710 = vmatmul.mubr.f32.gmra.mrb[0].mxu0 %v638
        %v711 = vpop.f32.mrb[0].mxu0
        %v712 = vadd.f32 %v632, %v711
        %v713 = vpop.f32.mrb[0].mxu0
        %714 = vdwg.mxu0
        %v715 = vadd.f32 %v707, %v343
        %v716 = vadd.f32 %v712, %v344
        %v717 = vadd.f32 %v715, %v716
        %v718 = vld [vmem:[%s3] sm:$0xff]
        %719 = vset.pattern.permute.xlu0 4
        %720 = vperm.xlu0 %719, %v345
        %v721 = vpop.permute.xlu0 %720
        %vm723 = vcmask 64512
        %v725 = vsel %vm723, %v718, 0
        %727 = vmatprep.subr.mxu0 0.0
        %728 = vmatpush1.msra.mxu0 %v717
        %729 = vmatprep.subr.mxu0 0.0
        %730 = vmatpush1.msra.mxu0 0.0
        %731 = vmatprep.subr.mxu0 0.0
        %732 = vmatpush1.msra.mxu0 0.0
        %733 = vmatprep.subr.mxu0 0.0
        %734 = vmatpush1.msra.mxu0 0.0
        %735 = vmatprep.subr.mxu0 0.0
        %736 = vmatpush1.msra.mxu0 0.0
        %737 = vmatprep.subr.mxu0 0.0
        %738 = vmatpush1.msra.mxu0 0.0
        %739 = vmatprep.subr.mxu0 0.0
        %740 = vmatpush1.msra.mxu0 0.0
        %741 = vmatprep.subr.mxu0 0.0
        %742 = vmatpush1.msra.mxu0 0.0
        %743 = vmatprep.subr.mxu0 0.0
        %744 = vmatpush1.msra.mxu0 0.0
        %745 = vmatprep.subr.mxu0 0.0
        %746 = vmatpush1.msra.mxu0 0.0
        %747 = vmatprep.subr.mxu0 0.0
        %748 = vmatpush1.msra.mxu0 0.0
        %749 = vmatprep.subr.mxu0 0.0
        %750 = vmatpush1.msra.mxu0 0.0
        %751 = vmatprep.subr.mxu0 0.0
        %752 = vmatpush1.msra.mxu0 0.0
        %753 = vmatprep.subr.mxu0 0.0
        %754 = vmatpush1.msra.mxu0 0.0
        %755 = vmatprep.subr.mxu0 0.0
        %756 = vmatpush1.msra.mxu0 0.0
        %757 = vmatprep.subr.mxu0 0.0
        %758 = vmatpush1.msra.mxu0 0.0
        %759 = vmatprep.subr.mxu0 0.0
        %760 = vmatpush1.msra.mxu0 0.0
        %761 = vmatprep.subr.mxu0 0.0
        %762 = vmatpush1.msra.mxu0 0.0
        %763 = vmatprep.subr.mxu0 0.0
        %764 = vmatpush1.msra.mxu0 0.0
        %765 = vmatprep.subr.mxu0 0.0
        %766 = vmatpush1.msra.mxu0 0.0
        %767 = vmatprep.subr.mxu0 0.0
        %768 = vmatpush1.msra.mxu0 0.0
        %769 = vmatprep.subr.mxu0 0.0
        %770 = vmatpush1.msra.mxu0 0.0
        %771 = vmatprep.subr.mxu0 0.0
        %772 = vmatpush1.msra.mxu0 0.0
        %773 = vmatprep.subr.mxu0 0.0
        %774 = vmatpush1.msra.mxu0 0.0
        %775 = vmatprep.subr.mxu0 0.0
        %776 = vmatpush1.msra.mxu0 0.0
        %777 = vmatprep.subr.mxu0 0.0
        %778 = vmatpush1.msra.mxu0 0.0
        %779 = vmatprep.subr.mxu0 0.0
        %780 = vmatpush1.msra.mxu0 0.0
        %781 = vmatprep.subr.mxu0 0.0
        %782 = vmatpush1.msra.mxu0 0.0
        %783 = vmatprep.subr.mxu0 0.0
        %784 = vmatpush1.msra.mxu0 0.0
        %785 = vmatprep.subr.mxu0 0.0
        %786 = vmatpush1.msra.mxu0 0.0
        %787 = vmatprep.subr.mxu0 0.0
        %788 = vmatpush1.msra.mxu0 0.0
        %789 = vmatprep.subr.mxu0 0.0
        %790 = vmatpush1.msra.mxu0 0.0
        %791 = vmatprep.mubr.f32.mxu0 0.0
        %792 = vmatmul.mubr.f32.gmra.mrb[0].mxu0 %v725
        %v793 = vpop.f32.mrb[0].mxu0
        %v794 = vadd.f32 %v721, %v793
        %v795 = vpop.f32.mrb[0].mxu0
        %796 = vdwg.mxu0
        %v797 = vmax.f32 %v794, 0.0
        %s798 = scalar_lea.vmem %s3, 8
        %v799 = vld [vmem:[%s798] sm:$0xff]
        %800 = vset.pattern.permute.xlu0 5
        %801 = vperm.xlu0 %800, %v345
        %v802 = vpop.permute.xlu0 %801
        %v805 = vsel %vm723, %v799, 0
        %807 = vmatprep.subr.mxu0 0.0
        %808 = vmatpush1.msra.mxu0 %v797
        %809 = vmatprep.subr.mxu0 0.0
        %810 = vmatpush1.msra.mxu0 0.0
        %811 = vmatprep.subr.mxu0 0.0
        %812 = vmatpush1.msra.mxu0 0.0
        %813 = vmatprep.subr.mxu0 0.0
        %814 = vmatpush1.msra.mxu0 0.0
        %815 = vmatprep.subr.mxu0 0.0
        %816 = vmatpush1.msra.mxu0 0.0
        %817 = vmatprep.subr.mxu0 0.0
        %818 = vmatpush1.msra.mxu0 0.0
        %819 = vmatprep.subr.mxu0 0.0
        %820 = vmatpush1.msra.mxu0 0.0
        %821 = vmatprep.subr.mxu0 0.0
        %822 = vmatpush1.msra.mxu0 0.0
        %823 = vmatprep.subr.mxu0 0.0
        %824 = vmatpush1.msra.mxu0 0.0
        %825 = vmatprep.subr.mxu0 0.0
        %826 = vmatpush1.msra.mxu0 0.0
        %827 = vmatprep.subr.mxu0 0.0
        %828 = vmatpush1.msra.mxu0 0.0
        %829 = vmatprep.subr.mxu0 0.0
        %830 = vmatpush1.msra.mxu0 0.0
        %831 = vmatprep.subr.mxu0 0.0
        %832 = vmatpush1.msra.mxu0 0.0
        %833 = vmatprep.subr.mxu0 0.0
        %834 = vmatpush1.msra.mxu0 0.0
        %835 = vmatprep.subr.mxu0 0.0
        %836 = vmatpush1.msra.mxu0 0.0
        %837 = vmatprep.subr.mxu0 0.0
        %838 = vmatpush1.msra.mxu0 0.0
        %839 = vmatprep.subr.mxu0 0.0
        %840 = vmatpush1.msra.mxu0 0.0
        %841 = vmatprep.subr.mxu0 0.0
        %842 = vmatpush1.msra.mxu0 0.0
        %843 = vmatprep.subr.mxu0 0.0
        %844 = vmatpush1.msra.mxu0 0.0
        %845 = vmatprep.subr.mxu0 0.0
        %846 = vmatpush1.msra.mxu0 0.0
        %847 = vmatprep.subr.mxu0 0.0
        %848 = vmatpush1.msra.mxu0 0.0
        %849 = vmatprep.subr.mxu0 0.0
        %850 = vmatpush1.msra.mxu0 0.0
        %851 = vmatprep.subr.mxu0 0.0
        %852 = vmatpush1.msra.mxu0 0.0
        %853 = vmatprep.subr.mxu0 0.0
        %854 = vmatpush1.msra.mxu0 0.0
        %855 = vmatprep.subr.mxu0 0.0
        %856 = vmatpush1.msra.mxu0 0.0
        %857 = vmatprep.subr.mxu0 0.0
        %858 = vmatpush1.msra.mxu0 0.0
        %859 = vmatprep.subr.mxu0 0.0
        %860 = vmatpush1.msra.mxu0 0.0
        %861 = vmatprep.subr.mxu0 0.0
        %862 = vmatpush1.msra.mxu0 0.0
        %863 = vmatprep.subr.mxu0 0.0
        %864 = vmatpush1.msra.mxu0 0.0
        %865 = vmatprep.subr.mxu0 0.0
        %866 = vmatpush1.msra.mxu0 0.0
        %867 = vmatprep.subr.mxu0 0.0
        %868 = vmatpush1.msra.mxu0 0.0
        %869 = vmatprep.subr.mxu0 0.0
        %870 = vmatpush1.msra.mxu0 0.0
        %871 = vmatprep.mubr.f32.mxu0 0.0
        %872 = vmatmul.mubr.f32.gmra.mrb[0].mxu0 %v805
        %v873 = vpop.f32.mrb[0].mxu0
        %v874 = vadd.f32 %v802, %v873
        %v875 = vpop.f32.mrb[0].mxu0
        %876 = vdwg.mxu0
        %v877 = vadd.f32 %v874, %v717
        %v878 = vrot.slane %v877, 4
        %v879 = vadd.f32 %v877, %v878
        %v880 = vrot.slane %v879, 2
        %v881 = vadd.f32 %v879, %v880
        %v882 = vrot.slane %v881, 1
        %v883 = vadd.f32 %v881, %v882
        %v884 = vrcp.pop 8.0
        %v885 = vmul.f32 %v883, %v884
        %v886 = vsub.f32 %v877, %v885
        %v887 = vmul.f32 %v886, %v886
        %v888 = vrot.slane %v887, 4
        %v889 = vadd.f32 %v887, %v888
        %v890 = vrot.slane %v889, 2
        %v891 = vadd.f32 %v889, %v890
        %v892 = vrot.slane %v891, 1
        %v893 = vadd.f32 %v891, %v892
        %v894 = vmul.f32 %v893, %v884
        %v895 = vadd.f32 %v894, 1e-05
        %v896 = vrsqrt.pop %v895
        %v897 = vmul.f32 %v886, %v896
        %898 = vset.pattern.permute.xlu0 6
        %899 = vperm.xlu0 %898, %v345
        %v900 = vpop.permute.xlu0 %899
        %v902 = vmul.f32 %v897, %v900
        %903 = vset.pattern.permute.xlu0 7
        %904 = vperm.xlu0 %903, %v345
        %v905 = vpop.permute.xlu0 %904
        %v907 = vadd.f32 %v902, %v905
        %s908 = scalar_lea.vmem %s3, 16
        %v909 = vld [vmem:[%s908] sm:$0xff]
        %910 = vset.pattern.permute.xlu0 8
        %911 = vperm.xlu0 %910, %v345
        %v912 = vpop.permute.xlu0 %911
        %v915 = vsel %vm723, %v909, 0
        %917 = vmatprep.subr.mxu0 0.0
        %918 = vmatpush1.msra.mxu0 %v907
        %919 = vmatprep.subr.mxu0 0.0
        %920 = vmatpush1.msra.mxu0 0.0
        %921 = vmatprep.subr.mxu0 0.0
        %922 = vmatpush1.msra.mxu0 0.0
        %923 = vmatprep.subr.mxu0 0.0
        %924 = vmatpush1.msra.mxu0 0.0
        %925 = vmatprep.subr.mxu0 0.0
        %926 = vmatpush1.msra.mxu0 0.0
        %927 = vmatprep.subr.mxu0 0.0
        %928 = vmatpush1.msra.mxu0 0.0
        %929 = vmatprep.subr.mxu0 0.0
        %930 = vmatpush1.msra.mxu0 0.0
        %931 = vmatprep.subr.mxu0 0.0
        %932 = vmatpush1.msra.mxu0 0.0
        %933 = vmatprep.subr.mxu0 0.0
        %934 = vmatpush1.msra.mxu0 0.0
        %935 = vmatprep.subr.mxu0 0.0
        %936 = vmatpush1.msra.mxu0 0.0
        %937 = vmatprep.subr.mxu0 0.0
        %938 = vmatpush1.msra.mxu0 0.0
        %939 = vmatprep.subr.mxu0 0.0
        %940 = vmatpush1.msra.mxu0 0.0
        %941 = vmatprep.subr.mxu0 0.0
        %942 = vmatpush1.msra.mxu0 0.0
        %943 = vmatprep.subr.mxu0 0.0
        %944 = vmatpush1.msra.mxu0 0.0
        %945 = vmatprep.subr.mxu0 0.0
        %946 = vmatpush1.msra.mxu0 0.0
        %947 = vmatprep.subr.mxu0 0.0
        %948 = vmatpush1.msra.mxu0 0.0
        %949 = vmatprep.subr.mxu0 0.0
        %950 = vmatpush1.msra.mxu0 0.0
        %951 = vmatprep.subr.mxu0 0.0
        %952 = vmatpush1.msra.mxu0 0.0
        %953 = vmatprep.subr.mxu0 0.0
        %954 = vmatpush1.msra.mxu0 0.0
        %955 = vmatprep.subr.mxu0 0.0
        %956 = vmatpush1.msra.mxu0 0.0
        %957 = vmatprep.subr.mxu0 0.0
        %958 = vmatpush1.msra.mxu0 0.0
        %959 = vmatprep.subr.mxu0 0.0
        %960 = vmatpush1.msra.mxu0 0.0
        %961 = vmatprep.subr.mxu0 0.0
        %962 = vmatpush1.msra.mxu0 0.0
        %963 = vmatprep.subr.mxu0 0.0
        %964 = vmatpush1.msra.mxu0 0.0
        %965 = vmatprep.subr.mxu0 0.0
        %966 = vmatpush1.msra.mxu0 0.0
        %967 = vmatprep.subr.mxu0 0.0
        %968 = vmatpush1.msra.mxu0 0.0
        %969 = vmatprep.subr.mxu0 0.0
        %970 = vmatpush1.msra.mxu0 0.0
        %971 = vmatprep.subr.mxu0 0.0
        %972 = vmatpush1.msra.mxu0 0.0
        %973 = vmatprep.subr.mxu0 0.0
        %974 = vmatpush1.msra.mxu0 0.0
        %975 = vmatprep.subr.mxu0 0.0
        %976 = vmatpush1.msra.mxu0 0.0
        %977 = vmatprep.subr.mxu0 0.0
        %978 = vmatpush1.msra.mxu0 0.0
        %979 = vmatprep.subr.mxu0 0.0
        %980 = vmatpush1.msra.mxu0 0.0
        %981 = vmatprep.mubr.f32.mxu0 0.0
        %982 = vmatmul.mubr.f32.gmra.mrb[0].mxu0 %v915
        %v983 = vpop.f32.mrb[0].mxu0
        %v984 = vadd.f32 %v912, %v983
        %v985 = vpop.f32.mrb[0].mxu0
        %986 = vdwg.mxu0
        %987 = vst [vmem:[%s340] sm:$0xff] %v984
        %p988 = scmp.lt.s32.totalorder %s21, 1
        %s989 = scalar_select %p988, %s21, 1
        %p990 = scmp.lt.s32.totalorder %s22, 1
        %s991 = scalar_select %p990, %s22, 1
        %s992 = smul.addr %s989, 2
        %s993 = sadd.s32 %s991, %s992
        %s994 = smul.addr %s993, 8
        %s995 = scalar_lea.vmem %s6, %s994
        // Predicated region
        $region86: #{resnet_attn_forward.3} parent=80 // pred_check
          %p996 = pneg %p187
        $region87: #{resnet_attn_forward.3} parent=80 // pred_check_branch
          %998 = sbr.rel (%p996) target = $region89
        $region88: #{resnet_attn_forward.3} parent=80 // pred_region
          _
        $region89: #{resnet_attn_forward.3} parent=80 // pred_fallthru
          _
      $region81: #{resnet_attn_forward.3} parent=5 // pred_fallthru
        _
      %p999 = scmp.le.s32.totalorder 2, %s12
      // Predicated region
      $region90: #{resnet_attn_forward.3} parent=5 // pred_check
        %p1000 = pneg %p999
      $region91: #{resnet_attn_forward.3} parent=5 // pred_check_branch
        %1002 = sbr.rel (%p1000) target = $region93
      $region92: #{resnet_attn_forward.3} parent=5 // pred_region
        %s1003 = ssub.s32 %s12, 2
        // Predicated region
        $region94: #{resnet_attn_forward.3} parent=92 // pred_check
          %p1004 = pneg %p193
        $region95: #{resnet_attn_forward.3} parent=92 // pred_check_branch
          %1006 = sbr.rel (%p1004) target = $region97
        $region96: #{resnet_attn_forward.3} parent=92 // pred_region
          %p1007 = scmp.lt.s32.totalorder %s23, 1
          %s1008 = scalar_select %p1007, %s23, 1
          %p1009 = scmp.lt.s32.totalorder %s24, 1
          %s1010 = scalar_select %p1009, %s24, 1
          %s1011 = smul.addr %s1008, 2
          %s1012 = sadd.s32 %s1010, %s1011
          %s1013 = smul.addr %s1012, 8
          %s1014 = scalar_lea.vmem %s6, %s1013
        $region97: #{resnet_attn_forward.3} parent=92 // pred_fallthru
          _
      $region93: #{resnet_attn_forward.3} parent=5 // pred_fallthru
        _
    $region6: #{resnet_attn_forward.3} parent=1 // loop_footer
      %s16 = sadd.s32 1, %s12
    $region7: #{resnet_attn_forward.3} parent=1 // loop_footer_branch
      %11 = sbr.rel target = $region3
    $region8: #{resnet_attn_forward.3} parent=1 // loop_exit
      _

</llo_original>
